<compile_context>
chip_gen: v7x
topology: tpu7x:2x2x1
jax: 0.10.0
libtpu: 0.0.40
codegen_flags: <defaults>
</compile_context>

<pallas_src>
import numpy as np
import jax
import jax.numpy as jnp
from jax import lax
from jax.experimental import pallas as pl
from jax.experimental.pallas import tpu as pltpu


def _make_kernel(TB, CB, C, HW, W, k, pad):
    kk = k * k
    n_chunks = TB // CB

    def process_chunk(x_ref, wm_ref, bias, out_ref, start):
        # ---- channel-wise max / mean (torch.max / torch.mean over dim=1) ----
        x0 = x_ref[pl.ds(start, CB), pl.ds(0, HW)].astype(jnp.float32)
        mx = x0
        sm = x0
        for c in range(1, C):
            xc = x_ref[pl.ds(start, CB), pl.ds(c * HW, HW)].astype(jnp.float32)
            mx = jnp.maximum(mx, xc)
            sm = sm + xc
        av = sm * (1.0 / C)

        # ---- k*k conv: per tap one lane-roll (XLU) + mul/add (VPU) against
        #      weight*boundary-mask planes; zero padding handled by the masks ----
        acc = jnp.zeros((CB, HW), jnp.float32) + bias
        for t in range(kk):
            i, j = divmod(t, k)
            d = (i - pad) * W + (j - pad)          # flat source offset of this tap
            s = (-d) % HW                          # left-rotate by d (jnp.roll semantics)
            r_mx = mx if s == 0 else pltpu.roll(mx, shift=s, axis=1)
            r_av = av if s == 0 else pltpu.roll(av, shift=s, axis=1)
            acc = acc + r_mx * wm_ref[t] + r_av * wm_ref[kk + t]

        out_ref[pl.ds(start, CB), :] = jax.nn.sigmoid(acc).astype(out_ref.dtype)

    def kernel(x_ref, wm_ref, b_ref, out_ref):
        bias = b_ref[0]
        if n_chunks == 1:
            process_chunk(x_ref, wm_ref, bias, out_ref, 0)
        else:
            def body(chunk, carry):
                start = pl.multiple_of(chunk * CB, CB)
                process_chunk(x_ref, wm_ref, bias, out_ref, start)
                return carry
            lax.fori_loop(0, n_chunks, body, 0)

    return kernel


def spatial_attention(x, conv_w, conv_b, *, kernel_size, batch_tile=256):
    """x: (B, C, H, W); conv_w: (1, 2, k, k); conv_b: (1,). Returns (B, 1, H, W) f32."""
    B, C, H, W = x.shape
    k = kernel_size
    pad = k // 2
    HW = H * W
    kk = k * k

    # --- batch tiling --------------------------------------------------------
    CB = min(8, B)                                   # rows per in-kernel chunk
    n_chunks_total = pl.cdiv(B, CB)
    cps = max(1, batch_tile // CB)                   # chunks per grid step
    if n_chunks_total >= 2:
        cps = min(cps, n_chunks_total // 2)          # >= 2 grid steps for v7x megacore
    in_chunk_bytes = CB * C * HW * x.dtype.itemsize  # VMEM cap: 2x input block <= ~8 MiB
    cps = min(cps, max(1, (8 << 20) // max(1, 2 * in_chunk_bytes)), n_chunks_total)
    TB = cps * CB
    Bp = pl.cdiv(B, TB) * TB

    # --- lane-dense input slab (no spatial pad, no dtype upcast) --------------
    x2 = x.reshape(B, C * HW)
    if Bp != B:
        x2 = jnp.pad(x2, ((0, Bp - B), (0, 0)))

    # --- per-tap (conv weight * zero-pad boundary mask) planes ----------------
    masks = np.zeros((kk, H, W), np.float32)
    for t in range(kk):
        i, j = divmod(t, k)
        di, dj = i - pad, j - pad
        masks[t, max(0, -di):min(H, H - di), max(0, -dj):min(W, W - dj)] = 1.0
    masks = jnp.asarray(masks.reshape(kk, HW))
    wflat = conv_w.reshape(2, kk).astype(jnp.float32)     # [max-plane taps, avg-plane taps]
    wm = jnp.concatenate([wflat[0][:, None] * masks,
                          wflat[1][:, None] * masks], axis=0)       # (2*kk, HW)
    wm = jnp.broadcast_to(wm[:, None, :], (2 * kk, CB, HW))         # chunk-shaped rows
    bvec = conv_b.reshape(1).astype(jnp.float32)

    kernel = _make_kernel(TB, CB, C, HW, W, k, pad)

    out = pl.pallas_call(
        kernel,
        out_shape=jax.ShapeDtypeStruct((Bp, HW), jnp.float32),
        grid=(Bp // TB,),
        in_specs=[
            pl.BlockSpec((TB, C * HW), lambda b: (b, 0)),
            pl.BlockSpec((2 * kk, CB, HW), lambda b: (0, 0, 0)),   # constant block -> fetched once
            pl.BlockSpec(memory_space=pltpu.MemorySpace.SMEM),
        ],
        out_specs=pl.BlockSpec((TB, HW), lambda b: (b, 0)),
        compiler_params=pltpu.CompilerParams(
            dimension_semantics=("parallel",)),
    )(x2, wm, bvec)

    return out[:B].reshape(B, 1, H, W)


def reference(x, conv_w, conv_b, *, kernel_size):
    """Pure-JAX reference matching the PyTorch SpatialAttention forward."""
    mx = jnp.max(x, axis=1, keepdims=True)
    av = jnp.mean(x, axis=1, keepdims=True)
    r = jnp.concatenate([mx, av], axis=1)            # (B, 2, H, W)
    p = kernel_size // 2
    out = lax.conv_general_dilated(
        r, conv_w, window_strides=(1, 1),
        padding=((p, p), (p, p)),
        dimension_numbers=("NCHW", "OIHW", "NCHW"))
    return jax.nn.sigmoid(out + conv_b.reshape(1, -1, 1, 1))


if __name__ == "__main__":
    B, C, H, W = 2, 4, 16, 16
    kernel_size = 7

    keys = jax.random.split(jax.random.PRNGKey(0), 3)
    x = jax.random.normal(keys[0], (B, C, H, W), dtype=jnp.float32)
    conv_w = (0.1 * jax.random.normal(keys[1], (1, 2, kernel_size, kernel_size))).astype(jnp.float32)
    conv_b = (0.1 * jax.random.normal(keys[2], (1,))).astype(jnp.float32)

    y = spatial_attention(x, conv_w, conv_b, kernel_size=kernel_size)
    y = jax.block_until_ready(y)

    y_ref = reference(x, conv_w, conv_b, kernel_size=kernel_size)
    assert y.shape == (B, 1, H, W), y.shape
    err = float(jnp.max(jnp.abs(y - y_ref)))
    assert err < 1e-4, err
    print("KERNEL_OK")
</pallas_src>

<mosaic_0001>
module attributes {stable_mosaic.version = 11 : i64} {
  func.func @kernel(%arg0: i32, %arg1: memref<2x1024xf32, #tpu.memory_space<vmem>>, %arg2: memref<98x2x256xf32, #tpu.memory_space<vmem>>, %arg3: memref<1xf32, #tpu.memory_space<smem>>, %arg4: memref<2x256xf32, #tpu.memory_space<vmem>>) attributes {dimension_semantics = [#tpu.dimension_semantics<parallel>], iteration_bounds = array<i64: 1>, scalar_prefetch = 0 : i64, scratch_operands = 0 : i64, tpu.core_type = #tpu.core_type<tc>, window_params = [{transform_indices = @transform_0, window_bounds = array<i64: 2, 1024>}, {pipeline_mode = #tpu.pipeline_mode<synchronous>, transform_indices = @transform_1, window_bounds = array<i64: 98, 2, 256>}, {transform_indices = @transform_2, window_bounds = array<i64: 1>}, {transform_indices = @transform_3, window_bounds = array<i64: 2, 256>}]} {
    %c0 = arith.constant 0 : index
    %0 = memref.load %arg3[%c0] : memref<1xf32, #tpu.memory_space<smem>>
    %c0_0 = arith.constant 0 : index
    %c0_1 = arith.constant 0 : index
    %1 = vector.load %arg1[%c0_0, %c0_1] : memref<2x1024xf32, #tpu.memory_space<vmem>>, vector<2x256xf32>
    %c0_2 = arith.constant 0 : index
    %c256 = arith.constant 256 : index
    %2 = vector.load %arg1[%c0_2, %c256] : memref<2x1024xf32, #tpu.memory_space<vmem>>, vector<2x256xf32>
    %3 = arith.maximumf %1, %2 : vector<2x256xf32>
    %4 = arith.addf %1, %2 : vector<2x256xf32>
    %c0_3 = arith.constant 0 : index
    %c512 = arith.constant 512 : index
    %5 = vector.load %arg1[%c0_3, %c512] : memref<2x1024xf32, #tpu.memory_space<vmem>>, vector<2x256xf32>
    %6 = arith.maximumf %3, %5 : vector<2x256xf32>
    %7 = arith.addf %4, %5 : vector<2x256xf32>
    %c0_4 = arith.constant 0 : index
    %c768 = arith.constant 768 : index
    %8 = vector.load %arg1[%c0_4, %c768] : memref<2x1024xf32, #tpu.memory_space<vmem>>, vector<2x256xf32>
    %9 = arith.maximumf %6, %8 : vector<2x256xf32>
    %10 = arith.addf %7, %8 : vector<2x256xf32>
    %cst = arith.constant 2.500000e-01 : f32
    %11 = vector.broadcast %cst : f32 to vector<2x256xf32>
    %12 = arith.mulf %10, %11 : vector<2x256xf32>
    %cst_5 = arith.constant 0.000000e+00 : f32
    %13 = vector.broadcast %cst_5 : f32 to vector<2x256xf32>
    %14 = vector.broadcast %0 : f32 to vector<2x256xf32>
    %15 = arith.addf %13, %14 : vector<2x256xf32>
    %c51_i32 = arith.constant 51 : i32
    %16 = tpu.dynamic_rotate %9 by %c51_i32 dim 1 : vector<2x256xf32>, i32 -> vector<2x256xf32>
    %c51_i32_6 = arith.constant 51 : i32
    %17 = tpu.dynamic_rotate %12 by %c51_i32_6 dim 1 : vector<2x256xf32>, i32 -> vector<2x256xf32>
    %c0_7 = arith.constant 0 : index
    %c0_8 = arith.constant 0 : index
    %c0_9 = arith.constant 0 : index
    %18 = vector.load %arg2[%c0_7, %c0_8, %c0_9] : memref<98x2x256xf32, #tpu.memory_space<vmem>>, vector<1x2x256xf32>
    %19 = vector.shape_cast %18 : vector<1x2x256xf32> to vector<2x256xf32>
    %20 = arith.mulf %16, %19 : vector<2x256xf32>
    %21 = arith.addf %15, %20 : vector<2x256xf32>
    %c49 = arith.constant 49 : index
    %c0_10 = arith.constant 0 : index
    %c0_11 = arith.constant 0 : index
    %22 = vector.load %arg2[%c49, %c0_10, %c0_11] : memref<98x2x256xf32, #tpu.memory_space<vmem>>, vector<1x2x256xf32>
    %23 = vector.shape_cast %22 : vector<1x2x256xf32> to vector<2x256xf32>
    %24 = arith.mulf %17, %23 : vector<2x256xf32>
    %25 = arith.addf %21, %24 : vector<2x256xf32>
    %c50_i32 = arith.constant 50 : i32
    %26 = tpu.dynamic_rotate %9 by %c50_i32 dim 1 : vector<2x256xf32>, i32 -> vector<2x256xf32>
    %c50_i32_12 = arith.constant 50 : i32
    %27 = tpu.dynamic_rotate %12 by %c50_i32_12 dim 1 : vector<2x256xf32>, i32 -> vector<2x256xf32>
    %c1 = arith.constant 1 : index
    %c0_13 = arith.constant 0 : index
    %c0_14 = arith.constant 0 : index
    %28 = vector.load %arg2[%c1, %c0_13, %c0_14] : memref<98x2x256xf32, #tpu.memory_space<vmem>>, vector<1x2x256xf32>
    %29 = vector.shape_cast %28 : vector<1x2x256xf32> to vector<2x256xf32>
    %30 = arith.mulf %26, %29 : vector<2x256xf32>
    %31 = arith.addf %25, %30 : vector<2x256xf32>
    %c50 = arith.constant 50 : index
    %c0_15 = arith.constant 0 : index
    %c0_16 = arith.constant 0 : index
    %32 = vector.load %arg2[%c50, %c0_15, %c0_16] : memref<98x2x256xf32, #tpu.memory_space<vmem>>, vector<1x2x256xf32>
    %33 = vector.shape_cast %32 : vector<1x2x256xf32> to vector<2x256xf32>
    %34 = arith.mulf %27, %33 : vector<2x256xf32>
    %35 = arith.addf %31, %34 : vector<2x256xf32>
    %c49_i32 = arith.constant 49 : i32
    %36 = tpu.dynamic_rotate %9 by %c49_i32 dim 1 : vector<2x256xf32>, i32 -> vector<2x256xf32>
    %c49_i32_17 = arith.constant 49 : i32
    %37 = tpu.dynamic_rotate %12 by %c49_i32_17 dim 1 : vector<2x256xf32>, i32 -> vector<2x256xf32>
    %c2 = arith.constant 2 : index
    %c0_18 = arith.constant 0 : index
    %c0_19 = arith.constant 0 : index
    %38 = vector.load %arg2[%c2, %c0_18, %c0_19] : memref<98x2x256xf32, #tpu.memory_space<vmem>>, vector<1x2x256xf32>
    %39 = vector.shape_cast %38 : vector<1x2x256xf32> to vector<2x256xf32>
    %40 = arith.mulf %36, %39 : vector<2x256xf32>
    %41 = arith.addf %35, %40 : vector<2x256xf32>
    %c51 = arith.constant 51 : index
    %c0_20 = arith.constant 0 : index
    %c0_21 = arith.constant 0 : index
    %42 = vector.load %arg2[%c51, %c0_20, %c0_21] : memref<98x2x256xf32, #tpu.memory_space<vmem>>, vector<1x2x256xf32>
    %43 = vector.shape_cast %42 : vector<1x2x256xf32> to vector<2x256xf32>
    %44 = arith.mulf %37, %43 : vector<2x256xf32>
    %45 = arith.addf %41, %44 : vector<2x256xf32>
    %c48_i32 = arith.constant 48 : i32
    %46 = tpu.dynamic_rotate %9 by %c48_i32 dim 1 : vector<2x256xf32>, i32 -> vector<2x256xf32>
    %c48_i32_22 = arith.constant 48 : i32
    %47 = tpu.dynamic_rotate %12 by %c48_i32_22 dim 1 : vector<2x256xf32>, i32 -> vector<2x256xf32>
    %c3 = arith.constant 3 : index
    %c0_23 = arith.constant 0 : index
    %c0_24 = arith.constant 0 : index
    %48 = vector.load %arg2[%c3, %c0_23, %c0_24] : memref<98x2x256xf32, #tpu.memory_space<vmem>>, vector<1x2x256xf32>
    %49 = vector.shape_cast %48 : vector<1x2x256xf32> to vector<2x256xf32>
    %50 = arith.mulf %46, %49 : vector<2x256xf32>
    %51 = arith.addf %45, %50 : vector<2x256xf32>
    %c52 = arith.constant 52 : index
    %c0_25 = arith.constant 0 : index
    %c0_26 = arith.constant 0 : index
    %52 = vector.load %arg2[%c52, %c0_25, %c0_26] : memref<98x2x256xf32, #tpu.memory_space<vmem>>, vector<1x2x256xf32>
    %53 = vector.shape_cast %52 : vector<1x2x256xf32> to vector<2x256xf32>
    %54 = arith.mulf %47, %53 : vector<2x256xf32>
    %55 = arith.addf %51, %54 : vector<2x256xf32>
    %c47_i32 = arith.constant 47 : i32
    %56 = tpu.dynamic_rotate %9 by %c47_i32 dim 1 : vector<2x256xf32>, i32 -> vector<2x256xf32>
    %c47_i32_27 = arith.constant 47 : i32
    %57 = tpu.dynamic_rotate %12 by %c47_i32_27 dim 1 : vector<2x256xf32>, i32 -> vector<2x256xf32>
    %c4 = arith.constant 4 : index
    %c0_28 = arith.constant 0 : index
    %c0_29 = arith.constant 0 : index
    %58 = vector.load %arg2[%c4, %c0_28, %c0_29] : memref<98x2x256xf32, #tpu.memory_space<vmem>>, vector<1x2x256xf32>
    %59 = vector.shape_cast %58 : vector<1x2x256xf32> to vector<2x256xf32>
    %60 = arith.mulf %56, %59 : vector<2x256xf32>
    %61 = arith.addf %55, %60 : vector<2x256xf32>
    %c53 = arith.constant 53 : index
    %c0_30 = arith.constant 0 : index
    %c0_31 = arith.constant 0 : index
    %62 = vector.load %arg2[%c53, %c0_30, %c0_31] : memref<98x2x256xf32, #tpu.memory_space<vmem>>, vector<1x2x256xf32>
    %63 = vector.shape_cast %62 : vector<1x2x256xf32> to vector<2x256xf32>
    %64 = arith.mulf %57, %63 : vector<2x256xf32>
    %65 = arith.addf %61, %64 : vector<2x256xf32>
    %c46_i32 = arith.constant 46 : i32
    %66 = tpu.dynamic_rotate %9 by %c46_i32 dim 1 : vector<2x256xf32>, i32 -> vector<2x256xf32>
    %c46_i32_32 = arith.constant 46 : i32
    %67 = tpu.dynamic_rotate %12 by %c46_i32_32 dim 1 : vector<2x256xf32>, i32 -> vector<2x256xf32>
    %c5 = arith.constant 5 : index
    %c0_33 = arith.constant 0 : index
    %c0_34 = arith.constant 0 : index
    %68 = vector.load %arg2[%c5, %c0_33, %c0_34] : memref<98x2x256xf32, #tpu.memory_space<vmem>>, vector<1x2x256xf32>
    %69 = vector.shape_cast %68 : vector<1x2x256xf32> to vector<2x256xf32>
    %70 = arith.mulf %66, %69 : vector<2x256xf32>
    %71 = arith.addf %65, %70 : vector<2x256xf32>
    %c54 = arith.constant 54 : index
    %c0_35 = arith.constant 0 : index
    %c0_36 = arith.constant 0 : index
    %72 = vector.load %arg2[%c54, %c0_35, %c0_36] : memref<98x2x256xf32, #tpu.memory_space<vmem>>, vector<1x2x256xf32>
    %73 = vector.shape_cast %72 : vector<1x2x256xf32> to vector<2x256xf32>
    %74 = arith.mulf %67, %73 : vector<2x256xf32>
    %75 = arith.addf %71, %74 : vector<2x256xf32>
    %c45_i32 = arith.constant 45 : i32
    %76 = tpu.dynamic_rotate %9 by %c45_i32 dim 1 : vector<2x256xf32>, i32 -> vector<2x256xf32>
    %c45_i32_37 = arith.constant 45 : i32
    %77 = tpu.dynamic_rotate %12 by %c45_i32_37 dim 1 : vector<2x256xf32>, i32 -> vector<2x256xf32>
    %c6 = arith.constant 6 : index
    %c0_38 = arith.constant 0 : index
    %c0_39 = arith.constant 0 : index
    %78 = vector.load %arg2[%c6, %c0_38, %c0_39] : memref<98x2x256xf32, #tpu.memory_space<vmem>>, vector<1x2x256xf32>
    %79 = vector.shape_cast %78 : vector<1x2x256xf32> to vector<2x256xf32>
    %80 = arith.mulf %76, %79 : vector<2x256xf32>
    %81 = arith.addf %75, %80 : vector<2x256xf32>
    %c55 = arith.constant 55 : index
    %c0_40 = arith.constant 0 : index
    %c0_41 = arith.constant 0 : index
    %82 = vector.load %arg2[%c55, %c0_40, %c0_41] : memref<98x2x256xf32, #tpu.memory_space<vmem>>, vector<1x2x256xf32>
    %83 = vector.shape_cast %82 : vector<1x2x256xf32> to vector<2x256xf32>
    %84 = arith.mulf %77, %83 : vector<2x256xf32>
    %85 = arith.addf %81, %84 : vector<2x256xf32>
    %c35_i32 = arith.constant 35 : i32
    %86 = tpu.dynamic_rotate %9 by %c35_i32 dim 1 : vector<2x256xf32>, i32 -> vector<2x256xf32>
    %c35_i32_42 = arith.constant 35 : i32
    %87 = tpu.dynamic_rotate %12 by %c35_i32_42 dim 1 : vector<2x256xf32>, i32 -> vector<2x256xf32>
    %c7 = arith.constant 7 : index
    %c0_43 = arith.constant 0 : index
    %c0_44 = arith.constant 0 : index
    %88 = vector.load %arg2[%c7, %c0_43, %c0_44] : memref<98x2x256xf32, #tpu.memory_space<vmem>>, vector<1x2x256xf32>
    %89 = vector.shape_cast %88 : vector<1x2x256xf32> to vector<2x256xf32>
    %90 = arith.mulf %86, %89 : vector<2x256xf32>
    %91 = arith.addf %85, %90 : vector<2x256xf32>
    %c56 = arith.constant 56 : index
    %c0_45 = arith.constant 0 : index
    %c0_46 = arith.constant 0 : index
    %92 = vector.load %arg2[%c56, %c0_45, %c0_46] : memref<98x2x256xf32, #tpu.memory_space<vmem>>, vector<1x2x256xf32>
    %93 = vector.shape_cast %92 : vector<1x2x256xf32> to vector<2x256xf32>
    %94 = arith.mulf %87, %93 : vector<2x256xf32>
    %95 = arith.addf %91, %94 : vector<2x256xf32>
    %c34_i32 = arith.constant 34 : i32
    %96 = tpu.dynamic_rotate %9 by %c34_i32 dim 1 : vector<2x256xf32>, i32 -> vector<2x256xf32>
    %c34_i32_47 = arith.constant 34 : i32
    %97 = tpu.dynamic_rotate %12 by %c34_i32_47 dim 1 : vector<2x256xf32>, i32 -> vector<2x256xf32>
    %c8 = arith.constant 8 : index
    %c0_48 = arith.constant 0 : index
    %c0_49 = arith.constant 0 : index
    %98 = vector.load %arg2[%c8, %c0_48, %c0_49] : memref<98x2x256xf32, #tpu.memory_space<vmem>>, vector<1x2x256xf32>
    %99 = vector.shape_cast %98 : vector<1x2x256xf32> to vector<2x256xf32>
    %100 = arith.mulf %96, %99 : vector<2x256xf32>
    %101 = arith.addf %95, %100 : vector<2x256xf32>
    %c57 = arith.constant 57 : index
    %c0_50 = arith.constant 0 : index
    %c0_51 = arith.constant 0 : index
    %102 = vector.load %arg2[%c57, %c0_50, %c0_51] : memref<98x2x256xf32, #tpu.memory_space<vmem>>, vector<1x2x256xf32>
    %103 = vector.shape_cast %102 : vector<1x2x256xf32> to vector<2x256xf32>
    %104 = arith.mulf %97, %103 : vector<2x256xf32>
    %105 = arith.addf %101, %104 : vector<2x256xf32>
    %c33_i32 = arith.constant 33 : i32
    %106 = tpu.dynamic_rotate %9 by %c33_i32 dim 1 : vector<2x256xf32>, i32 -> vector<2x256xf32>
    %c33_i32_52 = arith.constant 33 : i32
    %107 = tpu.dynamic_rotate %12 by %c33_i32_52 dim 1 : vector<2x256xf32>, i32 -> vector<2x256xf32>
    %c9 = arith.constant 9 : index
    %c0_53 = arith.constant 0 : index
    %c0_54 = arith.constant 0 : index
    %108 = vector.load %arg2[%c9, %c0_53, %c0_54] : memref<98x2x256xf32, #tpu.memory_space<vmem>>, vector<1x2x256xf32>
    %109 = vector.shape_cast %108 : vector<1x2x256xf32> to vector<2x256xf32>
    %110 = arith.mulf %106, %109 : vector<2x256xf32>
    %111 = arith.addf %105, %110 : vector<2x256xf32>
    %c58 = arith.constant 58 : index
    %c0_55 = arith.constant 0 : index
    %c0_56 = arith.constant 0 : index
    %112 = vector.load %arg2[%c58, %c0_55, %c0_56] : memref<98x2x256xf32, #tpu.memory_space<vmem>>, vector<1x2x256xf32>
    %113 = vector.shape_cast %112 : vector<1x2x256xf32> to vector<2x256xf32>
    %114 = arith.mulf %107, %113 : vector<2x256xf32>
    %115 = arith.addf %111, %114 : vector<2x256xf32>
    %c32_i32 = arith.constant 32 : i32
    %116 = tpu.dynamic_rotate %9 by %c32_i32 dim 1 : vector<2x256xf32>, i32 -> vector<2x256xf32>
    %c32_i32_57 = arith.constant 32 : i32
    %117 = tpu.dynamic_rotate %12 by %c32_i32_57 dim 1 : vector<2x256xf32>, i32 -> vector<2x256xf32>
    %c10 = arith.constant 10 : index
    %c0_58 = arith.constant 0 : index
    %c0_59 = arith.constant 0 : index
    %118 = vector.load %arg2[%c10, %c0_58, %c0_59] : memref<98x2x256xf32, #tpu.memory_space<vmem>>, vector<1x2x256xf32>
    %119 = vector.shape_cast %118 : vector<1x2x256xf32> to vector<2x256xf32>
    %120 = arith.mulf %116, %119 : vector<2x256xf32>
    %121 = arith.addf %115, %120 : vector<2x256xf32>
    %c59 = arith.constant 59 : index
    %c0_60 = arith.constant 0 : index
    %c0_61 = arith.constant 0 : index
    %122 = vector.load %arg2[%c59, %c0_60, %c0_61] : memref<98x2x256xf32, #tpu.memory_space<vmem>>, vector<1x2x256xf32>
    %123 = vector.shape_cast %122 : vector<1x2x256xf32> to vector<2x256xf32>
    %124 = arith.mulf %117, %123 : vector<2x256xf32>
    %125 = arith.addf %121, %124 : vector<2x256xf32>
    %c31_i32 = arith.constant 31 : i32
    %126 = tpu.dynamic_rotate %9 by %c31_i32 dim 1 : vector<2x256xf32>, i32 -> vector<2x256xf32>
    %c31_i32_62 = arith.constant 31 : i32
    %127 = tpu.dynamic_rotate %12 by %c31_i32_62 dim 1 : vector<2x256xf32>, i32 -> vector<2x256xf32>
    %c11 = arith.constant 11 : index
    %c0_63 = arith.constant 0 : index
    %c0_64 = arith.constant 0 : index
    %128 = vector.load %arg2[%c11, %c0_63, %c0_64] : memref<98x2x256xf32, #tpu.memory_space<vmem>>, vector<1x2x256xf32>
    %129 = vector.shape_cast %128 : vector<1x2x256xf32> to vector<2x256xf32>
    %130 = arith.mulf %126, %129 : vector<2x256xf32>
    %131 = arith.addf %125, %130 : vector<2x256xf32>
    %c60 = arith.constant 60 : index
    %c0_65 = arith.constant 0 : index
    %c0_66 = arith.constant 0 : index
    %132 = vector.load %arg2[%c60, %c0_65, %c0_66] : memref<98x2x256xf32, #tpu.memory_space<vmem>>, vector<1x2x256xf32>
    %133 = vector.shape_cast %132 : vector<1x2x256xf32> to vector<2x256xf32>
    %134 = arith.mulf %127, %133 : vector<2x256xf32>
    %135 = arith.addf %131, %134 : vector<2x256xf32>
    %c30_i32 = arith.constant 30 : i32
    %136 = tpu.dynamic_rotate %9 by %c30_i32 dim 1 : vector<2x256xf32>, i32 -> vector<2x256xf32>
    %c30_i32_67 = arith.constant 30 : i32
    %137 = tpu.dynamic_rotate %12 by %c30_i32_67 dim 1 : vector<2x256xf32>, i32 -> vector<2x256xf32>
    %c12 = arith.constant 12 : index
    %c0_68 = arith.constant 0 : index
    %c0_69 = arith.constant 0 : index
    %138 = vector.load %arg2[%c12, %c0_68, %c0_69] : memref<98x2x256xf32, #tpu.memory_space<vmem>>, vector<1x2x256xf32>
    %139 = vector.shape_cast %138 : vector<1x2x256xf32> to vector<2x256xf32>
    %140 = arith.mulf %136, %139 : vector<2x256xf32>
    %141 = arith.addf %135, %140 : vector<2x256xf32>
    %c61 = arith.constant 61 : index
    %c0_70 = arith.constant 0 : index
    %c0_71 = arith.constant 0 : index
    %142 = vector.load %arg2[%c61, %c0_70, %c0_71] : memref<98x2x256xf32, #tpu.memory_space<vmem>>, vector<1x2x256xf32>
    %143 = vector.shape_cast %142 : vector<1x2x256xf32> to vector<2x256xf32>
    %144 = arith.mulf %137, %143 : vector<2x256xf32>
    %145 = arith.addf %141, %144 : vector<2x256xf32>
    %c29_i32 = arith.constant 29 : i32
    %146 = tpu.dynamic_rotate %9 by %c29_i32 dim 1 : vector<2x256xf32>, i32 -> vector<2x256xf32>
    %c29_i32_72 = arith.constant 29 : i32
    %147 = tpu.dynamic_rotate %12 by %c29_i32_72 dim 1 : vector<2x256xf32>, i32 -> vector<2x256xf32>
    %c13 = arith.constant 13 : index
    %c0_73 = arith.constant 0 : index
    %c0_74 = arith.constant 0 : index
    %148 = vector.load %arg2[%c13, %c0_73, %c0_74] : memref<98x2x256xf32, #tpu.memory_space<vmem>>, vector<1x2x256xf32>
    %149 = vector.shape_cast %148 : vector<1x2x256xf32> to vector<2x256xf32>
    %150 = arith.mulf %146, %149 : vector<2x256xf32>
    %151 = arith.addf %145, %150 : vector<2x256xf32>
    %c62 = arith.constant 62 : index
    %c0_75 = arith.constant 0 : index
    %c0_76 = arith.constant 0 : index
    %152 = vector.load %arg2[%c62, %c0_75, %c0_76] : memref<98x2x256xf32, #tpu.memory_space<vmem>>, vector<1x2x256xf32>
    %153 = vector.shape_cast %152 : vector<1x2x256xf32> to vector<2x256xf32>
    %154 = arith.mulf %147, %153 : vector<2x256xf32>
    %155 = arith.addf %151, %154 : vector<2x256xf32>
    %c19_i32 = arith.constant 19 : i32
    %156 = tpu.dynamic_rotate %9 by %c19_i32 dim 1 : vector<2x256xf32>, i32 -> vector<2x256xf32>
    %c19_i32_77 = arith.constant 19 : i32
    %157 = tpu.dynamic_rotate %12 by %c19_i32_77 dim 1 : vector<2x256xf32>, i32 -> vector<2x256xf32>
    %c14 = arith.constant 14 : index
    %c0_78 = arith.constant 0 : index
    %c0_79 = arith.constant 0 : index
    %158 = vector.load %arg2[%c14, %c0_78, %c0_79] : memref<98x2x256xf32, #tpu.memory_space<vmem>>, vector<1x2x256xf32>
    %159 = vector.shape_cast %158 : vector<1x2x256xf32> to vector<2x256xf32>
    %160 = arith.mulf %156, %159 : vector<2x256xf32>
    %161 = arith.addf %155, %160 : vector<2x256xf32>
    %c63 = arith.constant 63 : index
    %c0_80 = arith.constant 0 : index
    %c0_81 = arith.constant 0 : index
    %162 = vector.load %arg2[%c63, %c0_80, %c0_81] : memref<98x2x256xf32, #tpu.memory_space<vmem>>, vector<1x2x256xf32>
    %163 = vector.shape_cast %162 : vector<1x2x256xf32> to vector<2x256xf32>
    %164 = arith.mulf %157, %163 : vector<2x256xf32>
    %165 = arith.addf %161, %164 : vector<2x256xf32>
    %c18_i32 = arith.constant 18 : i32
    %166 = tpu.dynamic_rotate %9 by %c18_i32 dim 1 : vector<2x256xf32>, i32 -> vector<2x256xf32>
    %c18_i32_82 = arith.constant 18 : i32
    %167 = tpu.dynamic_rotate %12 by %c18_i32_82 dim 1 : vector<2x256xf32>, i32 -> vector<2x256xf32>
    %c15 = arith.constant 15 : index
    %c0_83 = arith.constant 0 : index
    %c0_84 = arith.constant 0 : index
    %168 = vector.load %arg2[%c15, %c0_83, %c0_84] : memref<98x2x256xf32, #tpu.memory_space<vmem>>, vector<1x2x256xf32>
    %169 = vector.shape_cast %168 : vector<1x2x256xf32> to vector<2x256xf32>
    %170 = arith.mulf %166, %169 : vector<2x256xf32>
    %171 = arith.addf %165, %170 : vector<2x256xf32>
    %c64 = arith.constant 64 : index
    %c0_85 = arith.constant 0 : index
    %c0_86 = arith.constant 0 : index
    %172 = vector.load %arg2[%c64, %c0_85, %c0_86] : memref<98x2x256xf32, #tpu.memory_space<vmem>>, vector<1x2x256xf32>
    %173 = vector.shape_cast %172 : vector<1x2x256xf32> to vector<2x256xf32>
    %174 = arith.mulf %167, %173 : vector<2x256xf32>
    %175 = arith.addf %171, %174 : vector<2x256xf32>
    %c17_i32 = arith.constant 17 : i32
    %176 = tpu.dynamic_rotate %9 by %c17_i32 dim 1 : vector<2x256xf32>, i32 -> vector<2x256xf32>
    %c17_i32_87 = arith.constant 17 : i32
    %177 = tpu.dynamic_rotate %12 by %c17_i32_87 dim 1 : vector<2x256xf32>, i32 -> vector<2x256xf32>
    %c16 = arith.constant 16 : index
    %c0_88 = arith.constant 0 : index
    %c0_89 = arith.constant 0 : index
    %178 = vector.load %arg2[%c16, %c0_88, %c0_89] : memref<98x2x256xf32, #tpu.memory_space<vmem>>, vector<1x2x256xf32>
    %179 = vector.shape_cast %178 : vector<1x2x256xf32> to vector<2x256xf32>
    %180 = arith.mulf %176, %179 : vector<2x256xf32>
    %181 = arith.addf %175, %180 : vector<2x256xf32>
    %c65 = arith.constant 65 : index
    %c0_90 = arith.constant 0 : index
    %c0_91 = arith.constant 0 : index
    %182 = vector.load %arg2[%c65, %c0_90, %c0_91] : memref<98x2x256xf32, #tpu.memory_space<vmem>>, vector<1x2x256xf32>
    %183 = vector.shape_cast %182 : vector<1x2x256xf32> to vector<2x256xf32>
    %184 = arith.mulf %177, %183 : vector<2x256xf32>
    %185 = arith.addf %181, %184 : vector<2x256xf32>
    %c16_i32 = arith.constant 16 : i32
    %186 = tpu.dynamic_rotate %9 by %c16_i32 dim 1 : vector<2x256xf32>, i32 -> vector<2x256xf32>
    %c16_i32_92 = arith.constant 16 : i32
    %187 = tpu.dynamic_rotate %12 by %c16_i32_92 dim 1 : vector<2x256xf32>, i32 -> vector<2x256xf32>
    %c17 = arith.constant 17 : index
    %c0_93 = arith.constant 0 : index
    %c0_94 = arith.constant 0 : index
    %188 = vector.load %arg2[%c17, %c0_93, %c0_94] : memref<98x2x256xf32, #tpu.memory_space<vmem>>, vector<1x2x256xf32>
    %189 = vector.shape_cast %188 : vector<1x2x256xf32> to vector<2x256xf32>
    %190 = arith.mulf %186, %189 : vector<2x256xf32>
    %191 = arith.addf %185, %190 : vector<2x256xf32>
    %c66 = arith.constant 66 : index
    %c0_95 = arith.constant 0 : index
    %c0_96 = arith.constant 0 : index
    %192 = vector.load %arg2[%c66, %c0_95, %c0_96] : memref<98x2x256xf32, #tpu.memory_space<vmem>>, vector<1x2x256xf32>
    %193 = vector.shape_cast %192 : vector<1x2x256xf32> to vector<2x256xf32>
    %194 = arith.mulf %187, %193 : vector<2x256xf32>
    %195 = arith.addf %191, %194 : vector<2x256xf32>
    %c15_i32 = arith.constant 15 : i32
    %196 = tpu.dynamic_rotate %9 by %c15_i32 dim 1 : vector<2x256xf32>, i32 -> vector<2x256xf32>
    %c15_i32_97 = arith.constant 15 : i32
    %197 = tpu.dynamic_rotate %12 by %c15_i32_97 dim 1 : vector<2x256xf32>, i32 -> vector<2x256xf32>
    %c18 = arith.constant 18 : index
    %c0_98 = arith.constant 0 : index
    %c0_99 = arith.constant 0 : index
    %198 = vector.load %arg2[%c18, %c0_98, %c0_99] : memref<98x2x256xf32, #tpu.memory_space<vmem>>, vector<1x2x256xf32>
    %199 = vector.shape_cast %198 : vector<1x2x256xf32> to vector<2x256xf32>
    %200 = arith.mulf %196, %199 : vector<2x256xf32>
    %201 = arith.addf %195, %200 : vector<2x256xf32>
    %c67 = arith.constant 67 : index
    %c0_100 = arith.constant 0 : index
    %c0_101 = arith.constant 0 : index
    %202 = vector.load %arg2[%c67, %c0_100, %c0_101] : memref<98x2x256xf32, #tpu.memory_space<vmem>>, vector<1x2x256xf32>
    %203 = vector.shape_cast %202 : vector<1x2x256xf32> to vector<2x256xf32>
    %204 = arith.mulf %197, %203 : vector<2x256xf32>
    %205 = arith.addf %201, %204 : vector<2x256xf32>
    %c14_i32 = arith.constant 14 : i32
    %206 = tpu.dynamic_rotate %9 by %c14_i32 dim 1 : vector<2x256xf32>, i32 -> vector<2x256xf32>
    %c14_i32_102 = arith.constant 14 : i32
    %207 = tpu.dynamic_rotate %12 by %c14_i32_102 dim 1 : vector<2x256xf32>, i32 -> vector<2x256xf32>
    %c19 = arith.constant 19 : index
    %c0_103 = arith.constant 0 : index
    %c0_104 = arith.constant 0 : index
    %208 = vector.load %arg2[%c19, %c0_103, %c0_104] : memref<98x2x256xf32, #tpu.memory_space<vmem>>, vector<1x2x256xf32>
    %209 = vector.shape_cast %208 : vector<1x2x256xf32> to vector<2x256xf32>
    %210 = arith.mulf %206, %209 : vector<2x256xf32>
    %211 = arith.addf %205, %210 : vector<2x256xf32>
    %c68 = arith.constant 68 : index
    %c0_105 = arith.constant 0 : index
    %c0_106 = arith.constant 0 : index
    %212 = vector.load %arg2[%c68, %c0_105, %c0_106] : memref<98x2x256xf32, #tpu.memory_space<vmem>>, vector<1x2x256xf32>
    %213 = vector.shape_cast %212 : vector<1x2x256xf32> to vector<2x256xf32>
    %214 = arith.mulf %207, %213 : vector<2x256xf32>
    %215 = arith.addf %211, %214 : vector<2x256xf32>
    %c13_i32 = arith.constant 13 : i32
    %216 = tpu.dynamic_rotate %9 by %c13_i32 dim 1 : vector<2x256xf32>, i32 -> vector<2x256xf32>
    %c13_i32_107 = arith.constant 13 : i32
    %217 = tpu.dynamic_rotate %12 by %c13_i32_107 dim 1 : vector<2x256xf32>, i32 -> vector<2x256xf32>
    %c20 = arith.constant 20 : index
    %c0_108 = arith.constant 0 : index
    %c0_109 = arith.constant 0 : index
    %218 = vector.load %arg2[%c20, %c0_108, %c0_109] : memref<98x2x256xf32, #tpu.memory_space<vmem>>, vector<1x2x256xf32>
    %219 = vector.shape_cast %218 : vector<1x2x256xf32> to vector<2x256xf32>
    %220 = arith.mulf %216, %219 : vector<2x256xf32>
    %221 = arith.addf %215, %220 : vector<2x256xf32>
    %c69 = arith.constant 69 : index
    %c0_110 = arith.constant 0 : index
    %c0_111 = arith.constant 0 : index
    %222 = vector.load %arg2[%c69, %c0_110, %c0_111] : memref<98x2x256xf32, #tpu.memory_space<vmem>>, vector<1x2x256xf32>
    %223 = vector.shape_cast %222 : vector<1x2x256xf32> to vector<2x256xf32>
    %224 = arith.mulf %217, %223 : vector<2x256xf32>
    %225 = arith.addf %221, %224 : vector<2x256xf32>
    %c3_i32 = arith.constant 3 : i32
    %226 = tpu.dynamic_rotate %9 by %c3_i32 dim 1 : vector<2x256xf32>, i32 -> vector<2x256xf32>
    %c3_i32_112 = arith.constant 3 : i32
    %227 = tpu.dynamic_rotate %12 by %c3_i32_112 dim 1 : vector<2x256xf32>, i32 -> vector<2x256xf32>
    %c21 = arith.constant 21 : index
    %c0_113 = arith.constant 0 : index
    %c0_114 = arith.constant 0 : index
    %228 = vector.load %arg2[%c21, %c0_113, %c0_114] : memref<98x2x256xf32, #tpu.memory_space<vmem>>, vector<1x2x256xf32>
    %229 = vector.shape_cast %228 : vector<1x2x256xf32> to vector<2x256xf32>
    %230 = arith.mulf %226, %229 : vector<2x256xf32>
    %231 = arith.addf %225, %230 : vector<2x256xf32>
    %c70 = arith.constant 70 : index
    %c0_115 = arith.constant 0 : index
    %c0_116 = arith.constant 0 : index
    %232 = vector.load %arg2[%c70, %c0_115, %c0_116] : memref<98x2x256xf32, #tpu.memory_space<vmem>>, vector<1x2x256xf32>
    %233 = vector.shape_cast %232 : vector<1x2x256xf32> to vector<2x256xf32>
    %234 = arith.mulf %227, %233 : vector<2x256xf32>
    %235 = arith.addf %231, %234 : vector<2x256xf32>
    %c2_i32 = arith.constant 2 : i32
    %236 = tpu.dynamic_rotate %9 by %c2_i32 dim 1 : vector<2x256xf32>, i32 -> vector<2x256xf32>
    %c2_i32_117 = arith.constant 2 : i32
    %237 = tpu.dynamic_rotate %12 by %c2_i32_117 dim 1 : vector<2x256xf32>, i32 -> vector<2x256xf32>
    %c22 = arith.constant 22 : index
    %c0_118 = arith.constant 0 : index
    %c0_119 = arith.constant 0 : index
    %238 = vector.load %arg2[%c22, %c0_118, %c0_119] : memref<98x2x256xf32, #tpu.memory_space<vmem>>, vector<1x2x256xf32>
    %239 = vector.shape_cast %238 : vector<1x2x256xf32> to vector<2x256xf32>
    %240 = arith.mulf %236, %239 : vector<2x256xf32>
    %241 = arith.addf %235, %240 : vector<2x256xf32>
    %c71 = arith.constant 71 : index
    %c0_120 = arith.constant 0 : index
    %c0_121 = arith.constant 0 : index
    %242 = vector.load %arg2[%c71, %c0_120, %c0_121] : memref<98x2x256xf32, #tpu.memory_space<vmem>>, vector<1x2x256xf32>
    %243 = vector.shape_cast %242 : vector<1x2x256xf32> to vector<2x256xf32>
    %244 = arith.mulf %237, %243 : vector<2x256xf32>
    %245 = arith.addf %241, %244 : vector<2x256xf32>
    %c1_i32 = arith.constant 1 : i32
    %246 = tpu.dynamic_rotate %9 by %c1_i32 dim 1 : vector<2x256xf32>, i32 -> vector<2x256xf32>
    %c1_i32_122 = arith.constant 1 : i32
    %247 = tpu.dynamic_rotate %12 by %c1_i32_122 dim 1 : vector<2x256xf32>, i32 -> vector<2x256xf32>
    %c23 = arith.constant 23 : index
    %c0_123 = arith.constant 0 : index
    %c0_124 = arith.constant 0 : index
    %248 = vector.load %arg2[%c23, %c0_123, %c0_124] : memref<98x2x256xf32, #tpu.memory_space<vmem>>, vector<1x2x256xf32>
    %249 = vector.shape_cast %248 : vector<1x2x256xf32> to vector<2x256xf32>
    %250 = arith.mulf %246, %249 : vector<2x256xf32>
    %251 = arith.addf %245, %250 : vector<2x256xf32>
    %c72 = arith.constant 72 : index
    %c0_125 = arith.constant 0 : index
    %c0_126 = arith.constant 0 : index
    %252 = vector.load %arg2[%c72, %c0_125, %c0_126] : memref<98x2x256xf32, #tpu.memory_space<vmem>>, vector<1x2x256xf32>
    %253 = vector.shape_cast %252 : vector<1x2x256xf32> to vector<2x256xf32>
    %254 = arith.mulf %247, %253 : vector<2x256xf32>
    %255 = arith.addf %251, %254 : vector<2x256xf32>
    %c24 = arith.constant 24 : index
    %c0_127 = arith.constant 0 : index
    %c0_128 = arith.constant 0 : index
    %256 = vector.load %arg2[%c24, %c0_127, %c0_128] : memref<98x2x256xf32, #tpu.memory_space<vmem>>, vector<1x2x256xf32>
    %257 = vector.shape_cast %256 : vector<1x2x256xf32> to vector<2x256xf32>
    %258 = arith.mulf %9, %257 : vector<2x256xf32>
    %259 = arith.addf %255, %258 : vector<2x256xf32>
    %c73 = arith.constant 73 : index
    %c0_129 = arith.constant 0 : index
    %c0_130 = arith.constant 0 : index
    %260 = vector.load %arg2[%c73, %c0_129, %c0_130] : memref<98x2x256xf32, #tpu.memory_space<vmem>>, vector<1x2x256xf32>
    %261 = vector.shape_cast %260 : vector<1x2x256xf32> to vector<2x256xf32>
    %262 = arith.mulf %12, %261 : vector<2x256xf32>
    %263 = arith.addf %259, %262 : vector<2x256xf32>
    %c255_i32 = arith.constant 255 : i32
    %264 = tpu.dynamic_rotate %9 by %c255_i32 dim 1 : vector<2x256xf32>, i32 -> vector<2x256xf32>
    %c255_i32_131 = arith.constant 255 : i32
    %265 = tpu.dynamic_rotate %12 by %c255_i32_131 dim 1 : vector<2x256xf32>, i32 -> vector<2x256xf32>
    %c25 = arith.constant 25 : index
    %c0_132 = arith.constant 0 : index
    %c0_133 = arith.constant 0 : index
    %266 = vector.load %arg2[%c25, %c0_132, %c0_133] : memref<98x2x256xf32, #tpu.memory_space<vmem>>, vector<1x2x256xf32>
    %267 = vector.shape_cast %266 : vector<1x2x256xf32> to vector<2x256xf32>
    %268 = arith.mulf %264, %267 : vector<2x256xf32>
    %269 = arith.addf %263, %268 : vector<2x256xf32>
    %c74 = arith.constant 74 : index
    %c0_134 = arith.constant 0 : index
    %c0_135 = arith.constant 0 : index
    %270 = vector.load %arg2[%c74, %c0_134, %c0_135] : memref<98x2x256xf32, #tpu.memory_space<vmem>>, vector<1x2x256xf32>
    %271 = vector.shape_cast %270 : vector<1x2x256xf32> to vector<2x256xf32>
    %272 = arith.mulf %265, %271 : vector<2x256xf32>
    %273 = arith.addf %269, %272 : vector<2x256xf32>
    %c254_i32 = arith.constant 254 : i32
    %274 = tpu.dynamic_rotate %9 by %c254_i32 dim 1 : vector<2x256xf32>, i32 -> vector<2x256xf32>
    %c254_i32_136 = arith.constant 254 : i32
    %275 = tpu.dynamic_rotate %12 by %c254_i32_136 dim 1 : vector<2x256xf32>, i32 -> vector<2x256xf32>
    %c26 = arith.constant 26 : index
    %c0_137 = arith.constant 0 : index
    %c0_138 = arith.constant 0 : index
    %276 = vector.load %arg2[%c26, %c0_137, %c0_138] : memref<98x2x256xf32, #tpu.memory_space<vmem>>, vector<1x2x256xf32>
    %277 = vector.shape_cast %276 : vector<1x2x256xf32> to vector<2x256xf32>
    %278 = arith.mulf %274, %277 : vector<2x256xf32>
    %279 = arith.addf %273, %278 : vector<2x256xf32>
    %c75 = arith.constant 75 : index
    %c0_139 = arith.constant 0 : index
    %c0_140 = arith.constant 0 : index
    %280 = vector.load %arg2[%c75, %c0_139, %c0_140] : memref<98x2x256xf32, #tpu.memory_space<vmem>>, vector<1x2x256xf32>
    %281 = vector.shape_cast %280 : vector<1x2x256xf32> to vector<2x256xf32>
    %282 = arith.mulf %275, %281 : vector<2x256xf32>
    %283 = arith.addf %279, %282 : vector<2x256xf32>
    %c253_i32 = arith.constant 253 : i32
    %284 = tpu.dynamic_rotate %9 by %c253_i32 dim 1 : vector<2x256xf32>, i32 -> vector<2x256xf32>
    %c253_i32_141 = arith.constant 253 : i32
    %285 = tpu.dynamic_rotate %12 by %c253_i32_141 dim 1 : vector<2x256xf32>, i32 -> vector<2x256xf32>
    %c27 = arith.constant 27 : index
    %c0_142 = arith.constant 0 : index
    %c0_143 = arith.constant 0 : index
    %286 = vector.load %arg2[%c27, %c0_142, %c0_143] : memref<98x2x256xf32, #tpu.memory_space<vmem>>, vector<1x2x256xf32>
    %287 = vector.shape_cast %286 : vector<1x2x256xf32> to vector<2x256xf32>
    %288 = arith.mulf %284, %287 : vector<2x256xf32>
    %289 = arith.addf %283, %288 : vector<2x256xf32>
    %c76 = arith.constant 76 : index
    %c0_144 = arith.constant 0 : index
    %c0_145 = arith.constant 0 : index
    %290 = vector.load %arg2[%c76, %c0_144, %c0_145] : memref<98x2x256xf32, #tpu.memory_space<vmem>>, vector<1x2x256xf32>
    %291 = vector.shape_cast %290 : vector<1x2x256xf32> to vector<2x256xf32>
    %292 = arith.mulf %285, %291 : vector<2x256xf32>
    %293 = arith.addf %289, %292 : vector<2x256xf32>
    %c243_i32 = arith.constant 243 : i32
    %294 = tpu.dynamic_rotate %9 by %c243_i32 dim 1 : vector<2x256xf32>, i32 -> vector<2x256xf32>
    %c243_i32_146 = arith.constant 243 : i32
    %295 = tpu.dynamic_rotate %12 by %c243_i32_146 dim 1 : vector<2x256xf32>, i32 -> vector<2x256xf32>
    %c28 = arith.constant 28 : index
    %c0_147 = arith.constant 0 : index
    %c0_148 = arith.constant 0 : index
    %296 = vector.load %arg2[%c28, %c0_147, %c0_148] : memref<98x2x256xf32, #tpu.memory_space<vmem>>, vector<1x2x256xf32>
    %297 = vector.shape_cast %296 : vector<1x2x256xf32> to vector<2x256xf32>
    %298 = arith.mulf %294, %297 : vector<2x256xf32>
    %299 = arith.addf %293, %298 : vector<2x256xf32>
    %c77 = arith.constant 77 : index
    %c0_149 = arith.constant 0 : index
    %c0_150 = arith.constant 0 : index
    %300 = vector.load %arg2[%c77, %c0_149, %c0_150] : memref<98x2x256xf32, #tpu.memory_space<vmem>>, vector<1x2x256xf32>
    %301 = vector.shape_cast %300 : vector<1x2x256xf32> to vector<2x256xf32>
    %302 = arith.mulf %295, %301 : vector<2x256xf32>
    %303 = arith.addf %299, %302 : vector<2x256xf32>
    %c242_i32 = arith.constant 242 : i32
    %304 = tpu.dynamic_rotate %9 by %c242_i32 dim 1 : vector<2x256xf32>, i32 -> vector<2x256xf32>
    %c242_i32_151 = arith.constant 242 : i32
    %305 = tpu.dynamic_rotate %12 by %c242_i32_151 dim 1 : vector<2x256xf32>, i32 -> vector<2x256xf32>
    %c29 = arith.constant 29 : index
    %c0_152 = arith.constant 0 : index
    %c0_153 = arith.constant 0 : index
    %306 = vector.load %arg2[%c29, %c0_152, %c0_153] : memref<98x2x256xf32, #tpu.memory_space<vmem>>, vector<1x2x256xf32>
    %307 = vector.shape_cast %306 : vector<1x2x256xf32> to vector<2x256xf32>
    %308 = arith.mulf %304, %307 : vector<2x256xf32>
    %309 = arith.addf %303, %308 : vector<2x256xf32>
    %c78 = arith.constant 78 : index
    %c0_154 = arith.constant 0 : index
    %c0_155 = arith.constant 0 : index
    %310 = vector.load %arg2[%c78, %c0_154, %c0_155] : memref<98x2x256xf32, #tpu.memory_space<vmem>>, vector<1x2x256xf32>
    %311 = vector.shape_cast %310 : vector<1x2x256xf32> to vector<2x256xf32>
    %312 = arith.mulf %305, %311 : vector<2x256xf32>
    %313 = arith.addf %309, %312 : vector<2x256xf32>
    %c241_i32 = arith.constant 241 : i32
    %314 = tpu.dynamic_rotate %9 by %c241_i32 dim 1 : vector<2x256xf32>, i32 -> vector<2x256xf32>
    %c241_i32_156 = arith.constant 241 : i32
    %315 = tpu.dynamic_rotate %12 by %c241_i32_156 dim 1 : vector<2x256xf32>, i32 -> vector<2x256xf32>
    %c30 = arith.constant 30 : index
    %c0_157 = arith.constant 0 : index
    %c0_158 = arith.constant 0 : index
    %316 = vector.load %arg2[%c30, %c0_157, %c0_158] : memref<98x2x256xf32, #tpu.memory_space<vmem>>, vector<1x2x256xf32>
    %317 = vector.shape_cast %316 : vector<1x2x256xf32> to vector<2x256xf32>
    %318 = arith.mulf %314, %317 : vector<2x256xf32>
    %319 = arith.addf %313, %318 : vector<2x256xf32>
    %c79 = arith.constant 79 : index
    %c0_159 = arith.constant 0 : index
    %c0_160 = arith.constant 0 : index
    %320 = vector.load %arg2[%c79, %c0_159, %c0_160] : memref<98x2x256xf32, #tpu.memory_space<vmem>>, vector<1x2x256xf32>
    %321 = vector.shape_cast %320 : vector<1x2x256xf32> to vector<2x256xf32>
    %322 = arith.mulf %315, %321 : vector<2x256xf32>
    %323 = arith.addf %319, %322 : vector<2x256xf32>
    %c240_i32 = arith.constant 240 : i32
    %324 = tpu.dynamic_rotate %9 by %c240_i32 dim 1 : vector<2x256xf32>, i32 -> vector<2x256xf32>
    %c240_i32_161 = arith.constant 240 : i32
    %325 = tpu.dynamic_rotate %12 by %c240_i32_161 dim 1 : vector<2x256xf32>, i32 -> vector<2x256xf32>
    %c31 = arith.constant 31 : index
    %c0_162 = arith.constant 0 : index
    %c0_163 = arith.constant 0 : index
    %326 = vector.load %arg2[%c31, %c0_162, %c0_163] : memref<98x2x256xf32, #tpu.memory_space<vmem>>, vector<1x2x256xf32>
    %327 = vector.shape_cast %326 : vector<1x2x256xf32> to vector<2x256xf32>
    %328 = arith.mulf %324, %327 : vector<2x256xf32>
    %329 = arith.addf %323, %328 : vector<2x256xf32>
    %c80 = arith.constant 80 : index
    %c0_164 = arith.constant 0 : index
    %c0_165 = arith.constant 0 : index
    %330 = vector.load %arg2[%c80, %c0_164, %c0_165] : memref<98x2x256xf32, #tpu.memory_space<vmem>>, vector<1x2x256xf32>
    %331 = vector.shape_cast %330 : vector<1x2x256xf32> to vector<2x256xf32>
    %332 = arith.mulf %325, %331 : vector<2x256xf32>
    %333 = arith.addf %329, %332 : vector<2x256xf32>
    %c239_i32 = arith.constant 239 : i32
    %334 = tpu.dynamic_rotate %9 by %c239_i32 dim 1 : vector<2x256xf32>, i32 -> vector<2x256xf32>
    %c239_i32_166 = arith.constant 239 : i32
    %335 = tpu.dynamic_rotate %12 by %c239_i32_166 dim 1 : vector<2x256xf32>, i32 -> vector<2x256xf32>
    %c32 = arith.constant 32 : index
    %c0_167 = arith.constant 0 : index
    %c0_168 = arith.constant 0 : index
    %336 = vector.load %arg2[%c32, %c0_167, %c0_168] : memref<98x2x256xf32, #tpu.memory_space<vmem>>, vector<1x2x256xf32>
    %337 = vector.shape_cast %336 : vector<1x2x256xf32> to vector<2x256xf32>
    %338 = arith.mulf %334, %337 : vector<2x256xf32>
    %339 = arith.addf %333, %338 : vector<2x256xf32>
    %c81 = arith.constant 81 : index
    %c0_169 = arith.constant 0 : index
    %c0_170 = arith.constant 0 : index
    %340 = vector.load %arg2[%c81, %c0_169, %c0_170] : memref<98x2x256xf32, #tpu.memory_space<vmem>>, vector<1x2x256xf32>
    %341 = vector.shape_cast %340 : vector<1x2x256xf32> to vector<2x256xf32>
    %342 = arith.mulf %335, %341 : vector<2x256xf32>
    %343 = arith.addf %339, %342 : vector<2x256xf32>
    %c238_i32 = arith.constant 238 : i32
    %344 = tpu.dynamic_rotate %9 by %c238_i32 dim 1 : vector<2x256xf32>, i32 -> vector<2x256xf32>
    %c238_i32_171 = arith.constant 238 : i32
    %345 = tpu.dynamic_rotate %12 by %c238_i32_171 dim 1 : vector<2x256xf32>, i32 -> vector<2x256xf32>
    %c33 = arith.constant 33 : index
    %c0_172 = arith.constant 0 : index
    %c0_173 = arith.constant 0 : index
    %346 = vector.load %arg2[%c33, %c0_172, %c0_173] : memref<98x2x256xf32, #tpu.memory_space<vmem>>, vector<1x2x256xf32>
    %347 = vector.shape_cast %346 : vector<1x2x256xf32> to vector<2x256xf32>
    %348 = arith.mulf %344, %347 : vector<2x256xf32>
    %349 = arith.addf %343, %348 : vector<2x256xf32>
    %c82 = arith.constant 82 : index
    %c0_174 = arith.constant 0 : index
    %c0_175 = arith.constant 0 : index
    %350 = vector.load %arg2[%c82, %c0_174, %c0_175] : memref<98x2x256xf32, #tpu.memory_space<vmem>>, vector<1x2x256xf32>
    %351 = vector.shape_cast %350 : vector<1x2x256xf32> to vector<2x256xf32>
    %352 = arith.mulf %345, %351 : vector<2x256xf32>
    %353 = arith.addf %349, %352 : vector<2x256xf32>
    %c237_i32 = arith.constant 237 : i32
    %354 = tpu.dynamic_rotate %9 by %c237_i32 dim 1 : vector<2x256xf32>, i32 -> vector<2x256xf32>
    %c237_i32_176 = arith.constant 237 : i32
    %355 = tpu.dynamic_rotate %12 by %c237_i32_176 dim 1 : vector<2x256xf32>, i32 -> vector<2x256xf32>
    %c34 = arith.constant 34 : index
    %c0_177 = arith.constant 0 : index
    %c0_178 = arith.constant 0 : index
    %356 = vector.load %arg2[%c34, %c0_177, %c0_178] : memref<98x2x256xf32, #tpu.memory_space<vmem>>, vector<1x2x256xf32>
    %357 = vector.shape_cast %356 : vector<1x2x256xf32> to vector<2x256xf32>
    %358 = arith.mulf %354, %357 : vector<2x256xf32>
    %359 = arith.addf %353, %358 : vector<2x256xf32>
    %c83 = arith.constant 83 : index
    %c0_179 = arith.constant 0 : index
    %c0_180 = arith.constant 0 : index
    %360 = vector.load %arg2[%c83, %c0_179, %c0_180] : memref<98x2x256xf32, #tpu.memory_space<vmem>>, vector<1x2x256xf32>
    %361 = vector.shape_cast %360 : vector<1x2x256xf32> to vector<2x256xf32>
    %362 = arith.mulf %355, %361 : vector<2x256xf32>
    %363 = arith.addf %359, %362 : vector<2x256xf32>
    %c227_i32 = arith.constant 227 : i32
    %364 = tpu.dynamic_rotate %9 by %c227_i32 dim 1 : vector<2x256xf32>, i32 -> vector<2x256xf32>
    %c227_i32_181 = arith.constant 227 : i32
    %365 = tpu.dynamic_rotate %12 by %c227_i32_181 dim 1 : vector<2x256xf32>, i32 -> vector<2x256xf32>
    %c35 = arith.constant 35 : index
    %c0_182 = arith.constant 0 : index
    %c0_183 = arith.constant 0 : index
    %366 = vector.load %arg2[%c35, %c0_182, %c0_183] : memref<98x2x256xf32, #tpu.memory_space<vmem>>, vector<1x2x256xf32>
    %367 = vector.shape_cast %366 : vector<1x2x256xf32> to vector<2x256xf32>
    %368 = arith.mulf %364, %367 : vector<2x256xf32>
    %369 = arith.addf %363, %368 : vector<2x256xf32>
    %c84 = arith.constant 84 : index
    %c0_184 = arith.constant 0 : index
    %c0_185 = arith.constant 0 : index
    %370 = vector.load %arg2[%c84, %c0_184, %c0_185] : memref<98x2x256xf32, #tpu.memory_space<vmem>>, vector<1x2x256xf32>
    %371 = vector.shape_cast %370 : vector<1x2x256xf32> to vector<2x256xf32>
    %372 = arith.mulf %365, %371 : vector<2x256xf32>
    %373 = arith.addf %369, %372 : vector<2x256xf32>
    %c226_i32 = arith.constant 226 : i32
    %374 = tpu.dynamic_rotate %9 by %c226_i32 dim 1 : vector<2x256xf32>, i32 -> vector<2x256xf32>
    %c226_i32_186 = arith.constant 226 : i32
    %375 = tpu.dynamic_rotate %12 by %c226_i32_186 dim 1 : vector<2x256xf32>, i32 -> vector<2x256xf32>
    %c36 = arith.constant 36 : index
    %c0_187 = arith.constant 0 : index
    %c0_188 = arith.constant 0 : index
    %376 = vector.load %arg2[%c36, %c0_187, %c0_188] : memref<98x2x256xf32, #tpu.memory_space<vmem>>, vector<1x2x256xf32>
    %377 = vector.shape_cast %376 : vector<1x2x256xf32> to vector<2x256xf32>
    %378 = arith.mulf %374, %377 : vector<2x256xf32>
    %379 = arith.addf %373, %378 : vector<2x256xf32>
    %c85 = arith.constant 85 : index
    %c0_189 = arith.constant 0 : index
    %c0_190 = arith.constant 0 : index
    %380 = vector.load %arg2[%c85, %c0_189, %c0_190] : memref<98x2x256xf32, #tpu.memory_space<vmem>>, vector<1x2x256xf32>
    %381 = vector.shape_cast %380 : vector<1x2x256xf32> to vector<2x256xf32>
    %382 = arith.mulf %375, %381 : vector<2x256xf32>
    %383 = arith.addf %379, %382 : vector<2x256xf32>
    %c225_i32 = arith.constant 225 : i32
    %384 = tpu.dynamic_rotate %9 by %c225_i32 dim 1 : vector<2x256xf32>, i32 -> vector<2x256xf32>
    %c225_i32_191 = arith.constant 225 : i32
    %385 = tpu.dynamic_rotate %12 by %c225_i32_191 dim 1 : vector<2x256xf32>, i32 -> vector<2x256xf32>
    %c37 = arith.constant 37 : index
    %c0_192 = arith.constant 0 : index
    %c0_193 = arith.constant 0 : index
    %386 = vector.load %arg2[%c37, %c0_192, %c0_193] : memref<98x2x256xf32, #tpu.memory_space<vmem>>, vector<1x2x256xf32>
    %387 = vector.shape_cast %386 : vector<1x2x256xf32> to vector<2x256xf32>
    %388 = arith.mulf %384, %387 : vector<2x256xf32>
    %389 = arith.addf %383, %388 : vector<2x256xf32>
    %c86 = arith.constant 86 : index
    %c0_194 = arith.constant 0 : index
    %c0_195 = arith.constant 0 : index
    %390 = vector.load %arg2[%c86, %c0_194, %c0_195] : memref<98x2x256xf32, #tpu.memory_space<vmem>>, vector<1x2x256xf32>
    %391 = vector.shape_cast %390 : vector<1x2x256xf32> to vector<2x256xf32>
    %392 = arith.mulf %385, %391 : vector<2x256xf32>
    %393 = arith.addf %389, %392 : vector<2x256xf32>
    %c224_i32 = arith.constant 224 : i32
    %394 = tpu.dynamic_rotate %9 by %c224_i32 dim 1 : vector<2x256xf32>, i32 -> vector<2x256xf32>
    %c224_i32_196 = arith.constant 224 : i32
    %395 = tpu.dynamic_rotate %12 by %c224_i32_196 dim 1 : vector<2x256xf32>, i32 -> vector<2x256xf32>
    %c38 = arith.constant 38 : index
    %c0_197 = arith.constant 0 : index
    %c0_198 = arith.constant 0 : index
    %396 = vector.load %arg2[%c38, %c0_197, %c0_198] : memref<98x2x256xf32, #tpu.memory_space<vmem>>, vector<1x2x256xf32>
    %397 = vector.shape_cast %396 : vector<1x2x256xf32> to vector<2x256xf32>
    %398 = arith.mulf %394, %397 : vector<2x256xf32>
    %399 = arith.addf %393, %398 : vector<2x256xf32>
    %c87 = arith.constant 87 : index
    %c0_199 = arith.constant 0 : index
    %c0_200 = arith.constant 0 : index
    %400 = vector.load %arg2[%c87, %c0_199, %c0_200] : memref<98x2x256xf32, #tpu.memory_space<vmem>>, vector<1x2x256xf32>
    %401 = vector.shape_cast %400 : vector<1x2x256xf32> to vector<2x256xf32>
    %402 = arith.mulf %395, %401 : vector<2x256xf32>
    %403 = arith.addf %399, %402 : vector<2x256xf32>
    %c223_i32 = arith.constant 223 : i32
    %404 = tpu.dynamic_rotate %9 by %c223_i32 dim 1 : vector<2x256xf32>, i32 -> vector<2x256xf32>
    %c223_i32_201 = arith.constant 223 : i32
    %405 = tpu.dynamic_rotate %12 by %c223_i32_201 dim 1 : vector<2x256xf32>, i32 -> vector<2x256xf32>
    %c39 = arith.constant 39 : index
    %c0_202 = arith.constant 0 : index
    %c0_203 = arith.constant 0 : index
    %406 = vector.load %arg2[%c39, %c0_202, %c0_203] : memref<98x2x256xf32, #tpu.memory_space<vmem>>, vector<1x2x256xf32>
    %407 = vector.shape_cast %406 : vector<1x2x256xf32> to vector<2x256xf32>
    %408 = arith.mulf %404, %407 : vector<2x256xf32>
    %409 = arith.addf %403, %408 : vector<2x256xf32>
    %c88 = arith.constant 88 : index
    %c0_204 = arith.constant 0 : index
    %c0_205 = arith.constant 0 : index
    %410 = vector.load %arg2[%c88, %c0_204, %c0_205] : memref<98x2x256xf32, #tpu.memory_space<vmem>>, vector<1x2x256xf32>
    %411 = vector.shape_cast %410 : vector<1x2x256xf32> to vector<2x256xf32>
    %412 = arith.mulf %405, %411 : vector<2x256xf32>
    %413 = arith.addf %409, %412 : vector<2x256xf32>
    %c222_i32 = arith.constant 222 : i32
    %414 = tpu.dynamic_rotate %9 by %c222_i32 dim 1 : vector<2x256xf32>, i32 -> vector<2x256xf32>
    %c222_i32_206 = arith.constant 222 : i32
    %415 = tpu.dynamic_rotate %12 by %c222_i32_206 dim 1 : vector<2x256xf32>, i32 -> vector<2x256xf32>
    %c40 = arith.constant 40 : index
    %c0_207 = arith.constant 0 : index
    %c0_208 = arith.constant 0 : index
    %416 = vector.load %arg2[%c40, %c0_207, %c0_208] : memref<98x2x256xf32, #tpu.memory_space<vmem>>, vector<1x2x256xf32>
    %417 = vector.shape_cast %416 : vector<1x2x256xf32> to vector<2x256xf32>
    %418 = arith.mulf %414, %417 : vector<2x256xf32>
    %419 = arith.addf %413, %418 : vector<2x256xf32>
    %c89 = arith.constant 89 : index
    %c0_209 = arith.constant 0 : index
    %c0_210 = arith.constant 0 : index
    %420 = vector.load %arg2[%c89, %c0_209, %c0_210] : memref<98x2x256xf32, #tpu.memory_space<vmem>>, vector<1x2x256xf32>
    %421 = vector.shape_cast %420 : vector<1x2x256xf32> to vector<2x256xf32>
    %422 = arith.mulf %415, %421 : vector<2x256xf32>
    %423 = arith.addf %419, %422 : vector<2x256xf32>
    %c221_i32 = arith.constant 221 : i32
    %424 = tpu.dynamic_rotate %9 by %c221_i32 dim 1 : vector<2x256xf32>, i32 -> vector<2x256xf32>
    %c221_i32_211 = arith.constant 221 : i32
    %425 = tpu.dynamic_rotate %12 by %c221_i32_211 dim 1 : vector<2x256xf32>, i32 -> vector<2x256xf32>
    %c41 = arith.constant 41 : index
    %c0_212 = arith.constant 0 : index
    %c0_213 = arith.constant 0 : index
    %426 = vector.load %arg2[%c41, %c0_212, %c0_213] : memref<98x2x256xf32, #tpu.memory_space<vmem>>, vector<1x2x256xf32>
    %427 = vector.shape_cast %426 : vector<1x2x256xf32> to vector<2x256xf32>
    %428 = arith.mulf %424, %427 : vector<2x256xf32>
    %429 = arith.addf %423, %428 : vector<2x256xf32>
    %c90 = arith.constant 90 : index
    %c0_214 = arith.constant 0 : index
    %c0_215 = arith.constant 0 : index
    %430 = vector.load %arg2[%c90, %c0_214, %c0_215] : memref<98x2x256xf32, #tpu.memory_space<vmem>>, vector<1x2x256xf32>
    %431 = vector.shape_cast %430 : vector<1x2x256xf32> to vector<2x256xf32>
    %432 = arith.mulf %425, %431 : vector<2x256xf32>
    %433 = arith.addf %429, %432 : vector<2x256xf32>
    %c211_i32 = arith.constant 211 : i32
    %434 = tpu.dynamic_rotate %9 by %c211_i32 dim 1 : vector<2x256xf32>, i32 -> vector<2x256xf32>
    %c211_i32_216 = arith.constant 211 : i32
    %435 = tpu.dynamic_rotate %12 by %c211_i32_216 dim 1 : vector<2x256xf32>, i32 -> vector<2x256xf32>
    %c42 = arith.constant 42 : index
    %c0_217 = arith.constant 0 : index
    %c0_218 = arith.constant 0 : index
    %436 = vector.load %arg2[%c42, %c0_217, %c0_218] : memref<98x2x256xf32, #tpu.memory_space<vmem>>, vector<1x2x256xf32>
    %437 = vector.shape_cast %436 : vector<1x2x256xf32> to vector<2x256xf32>
    %438 = arith.mulf %434, %437 : vector<2x256xf32>
    %439 = arith.addf %433, %438 : vector<2x256xf32>
    %c91 = arith.constant 91 : index
    %c0_219 = arith.constant 0 : index
    %c0_220 = arith.constant 0 : index
    %440 = vector.load %arg2[%c91, %c0_219, %c0_220] : memref<98x2x256xf32, #tpu.memory_space<vmem>>, vector<1x2x256xf32>
    %441 = vector.shape_cast %440 : vector<1x2x256xf32> to vector<2x256xf32>
    %442 = arith.mulf %435, %441 : vector<2x256xf32>
    %443 = arith.addf %439, %442 : vector<2x256xf32>
    %c210_i32 = arith.constant 210 : i32
    %444 = tpu.dynamic_rotate %9 by %c210_i32 dim 1 : vector<2x256xf32>, i32 -> vector<2x256xf32>
    %c210_i32_221 = arith.constant 210 : i32
    %445 = tpu.dynamic_rotate %12 by %c210_i32_221 dim 1 : vector<2x256xf32>, i32 -> vector<2x256xf32>
    %c43 = arith.constant 43 : index
    %c0_222 = arith.constant 0 : index
    %c0_223 = arith.constant 0 : index
    %446 = vector.load %arg2[%c43, %c0_222, %c0_223] : memref<98x2x256xf32, #tpu.memory_space<vmem>>, vector<1x2x256xf32>
    %447 = vector.shape_cast %446 : vector<1x2x256xf32> to vector<2x256xf32>
    %448 = arith.mulf %444, %447 : vector<2x256xf32>
    %449 = arith.addf %443, %448 : vector<2x256xf32>
    %c92 = arith.constant 92 : index
    %c0_224 = arith.constant 0 : index
    %c0_225 = arith.constant 0 : index
    %450 = vector.load %arg2[%c92, %c0_224, %c0_225] : memref<98x2x256xf32, #tpu.memory_space<vmem>>, vector<1x2x256xf32>
    %451 = vector.shape_cast %450 : vector<1x2x256xf32> to vector<2x256xf32>
    %452 = arith.mulf %445, %451 : vector<2x256xf32>
    %453 = arith.addf %449, %452 : vector<2x256xf32>
    %c209_i32 = arith.constant 209 : i32
    %454 = tpu.dynamic_rotate %9 by %c209_i32 dim 1 : vector<2x256xf32>, i32 -> vector<2x256xf32>
    %c209_i32_226 = arith.constant 209 : i32
    %455 = tpu.dynamic_rotate %12 by %c209_i32_226 dim 1 : vector<2x256xf32>, i32 -> vector<2x256xf32>
    %c44 = arith.constant 44 : index
    %c0_227 = arith.constant 0 : index
    %c0_228 = arith.constant 0 : index
    %456 = vector.load %arg2[%c44, %c0_227, %c0_228] : memref<98x2x256xf32, #tpu.memory_space<vmem>>, vector<1x2x256xf32>
    %457 = vector.shape_cast %456 : vector<1x2x256xf32> to vector<2x256xf32>
    %458 = arith.mulf %454, %457 : vector<2x256xf32>
    %459 = arith.addf %453, %458 : vector<2x256xf32>
    %c93 = arith.constant 93 : index
    %c0_229 = arith.constant 0 : index
    %c0_230 = arith.constant 0 : index
    %460 = vector.load %arg2[%c93, %c0_229, %c0_230] : memref<98x2x256xf32, #tpu.memory_space<vmem>>, vector<1x2x256xf32>
    %461 = vector.shape_cast %460 : vector<1x2x256xf32> to vector<2x256xf32>
    %462 = arith.mulf %455, %461 : vector<2x256xf32>
    %463 = arith.addf %459, %462 : vector<2x256xf32>
    %c208_i32 = arith.constant 208 : i32
    %464 = tpu.dynamic_rotate %9 by %c208_i32 dim 1 : vector<2x256xf32>, i32 -> vector<2x256xf32>
    %c208_i32_231 = arith.constant 208 : i32
    %465 = tpu.dynamic_rotate %12 by %c208_i32_231 dim 1 : vector<2x256xf32>, i32 -> vector<2x256xf32>
    %c45 = arith.constant 45 : index
    %c0_232 = arith.constant 0 : index
    %c0_233 = arith.constant 0 : index
    %466 = vector.load %arg2[%c45, %c0_232, %c0_233] : memref<98x2x256xf32, #tpu.memory_space<vmem>>, vector<1x2x256xf32>
    %467 = vector.shape_cast %466 : vector<1x2x256xf32> to vector<2x256xf32>
    %468 = arith.mulf %464, %467 : vector<2x256xf32>
    %469 = arith.addf %463, %468 : vector<2x256xf32>
    %c94 = arith.constant 94 : index
    %c0_234 = arith.constant 0 : index
    %c0_235 = arith.constant 0 : index
    %470 = vector.load %arg2[%c94, %c0_234, %c0_235] : memref<98x2x256xf32, #tpu.memory_space<vmem>>, vector<1x2x256xf32>
    %471 = vector.shape_cast %470 : vector<1x2x256xf32> to vector<2x256xf32>
    %472 = arith.mulf %465, %471 : vector<2x256xf32>
    %473 = arith.addf %469, %472 : vector<2x256xf32>
    %c207_i32 = arith.constant 207 : i32
    %474 = tpu.dynamic_rotate %9 by %c207_i32 dim 1 : vector<2x256xf32>, i32 -> vector<2x256xf32>
    %c207_i32_236 = arith.constant 207 : i32
    %475 = tpu.dynamic_rotate %12 by %c207_i32_236 dim 1 : vector<2x256xf32>, i32 -> vector<2x256xf32>
    %c46 = arith.constant 46 : index
    %c0_237 = arith.constant 0 : index
    %c0_238 = arith.constant 0 : index
    %476 = vector.load %arg2[%c46, %c0_237, %c0_238] : memref<98x2x256xf32, #tpu.memory_space<vmem>>, vector<1x2x256xf32>
    %477 = vector.shape_cast %476 : vector<1x2x256xf32> to vector<2x256xf32>
    %478 = arith.mulf %474, %477 : vector<2x256xf32>
    %479 = arith.addf %473, %478 : vector<2x256xf32>
    %c95 = arith.constant 95 : index
    %c0_239 = arith.constant 0 : index
    %c0_240 = arith.constant 0 : index
    %480 = vector.load %arg2[%c95, %c0_239, %c0_240] : memref<98x2x256xf32, #tpu.memory_space<vmem>>, vector<1x2x256xf32>
    %481 = vector.shape_cast %480 : vector<1x2x256xf32> to vector<2x256xf32>
    %482 = arith.mulf %475, %481 : vector<2x256xf32>
    %483 = arith.addf %479, %482 : vector<2x256xf32>
    %c206_i32 = arith.constant 206 : i32
    %484 = tpu.dynamic_rotate %9 by %c206_i32 dim 1 : vector<2x256xf32>, i32 -> vector<2x256xf32>
    %c206_i32_241 = arith.constant 206 : i32
    %485 = tpu.dynamic_rotate %12 by %c206_i32_241 dim 1 : vector<2x256xf32>, i32 -> vector<2x256xf32>
    %c47 = arith.constant 47 : index
    %c0_242 = arith.constant 0 : index
    %c0_243 = arith.constant 0 : index
    %486 = vector.load %arg2[%c47, %c0_242, %c0_243] : memref<98x2x256xf32, #tpu.memory_space<vmem>>, vector<1x2x256xf32>
    %487 = vector.shape_cast %486 : vector<1x2x256xf32> to vector<2x256xf32>
    %488 = arith.mulf %484, %487 : vector<2x256xf32>
    %489 = arith.addf %483, %488 : vector<2x256xf32>
    %c96 = arith.constant 96 : index
    %c0_244 = arith.constant 0 : index
    %c0_245 = arith.constant 0 : index
    %490 = vector.load %arg2[%c96, %c0_244, %c0_245] : memref<98x2x256xf32, #tpu.memory_space<vmem>>, vector<1x2x256xf32>
    %491 = vector.shape_cast %490 : vector<1x2x256xf32> to vector<2x256xf32>
    %492 = arith.mulf %485, %491 : vector<2x256xf32>
    %493 = arith.addf %489, %492 : vector<2x256xf32>
    %c205_i32 = arith.constant 205 : i32
    %494 = tpu.dynamic_rotate %9 by %c205_i32 dim 1 : vector<2x256xf32>, i32 -> vector<2x256xf32>
    %c205_i32_246 = arith.constant 205 : i32
    %495 = tpu.dynamic_rotate %12 by %c205_i32_246 dim 1 : vector<2x256xf32>, i32 -> vector<2x256xf32>
    %c48 = arith.constant 48 : index
    %c0_247 = arith.constant 0 : index
    %c0_248 = arith.constant 0 : index
    %496 = vector.load %arg2[%c48, %c0_247, %c0_248] : memref<98x2x256xf32, #tpu.memory_space<vmem>>, vector<1x2x256xf32>
    %497 = vector.shape_cast %496 : vector<1x2x256xf32> to vector<2x256xf32>
    %498 = arith.mulf %494, %497 : vector<2x256xf32>
    %499 = arith.addf %493, %498 : vector<2x256xf32>
    %c97 = arith.constant 97 : index
    %c0_249 = arith.constant 0 : index
    %c0_250 = arith.constant 0 : index
    %500 = vector.load %arg2[%c97, %c0_249, %c0_250] : memref<98x2x256xf32, #tpu.memory_space<vmem>>, vector<1x2x256xf32>
    %501 = vector.shape_cast %500 : vector<1x2x256xf32> to vector<2x256xf32>
    %502 = arith.mulf %495, %501 : vector<2x256xf32>
    %503 = arith.addf %499, %502 : vector<2x256xf32>
    %504 = arith.negf %503 : vector<2x256xf32>
    %505 = math.exp %504 : vector<2x256xf32>
    %cst_251 = arith.constant 1.000000e+00 : f32
    %506 = vector.broadcast %cst_251 : f32 to vector<2x256xf32>
    %507 = arith.addf %506, %505 : vector<2x256xf32>
    %508 = arith.divf %506, %507 : vector<2x256xf32>
    %c0_252 = arith.constant 0 : index
    %c0_253 = arith.constant 0 : index
    %509 = vector.load %arg4[%c0_252, %c0_253] : memref<2x256xf32, #tpu.memory_space<vmem>>, vector<2x256xf32>
    tpu.vector_store %arg4[%c0_252, %c0_253], %508 {strides = array<i32>} : memref<2x256xf32, #tpu.memory_space<vmem>>, vector<2x256xf32>,
    return
  }
  func.func @transform_0(%arg0: i32) -> (i32, i32) {
    %c0_i32 = arith.constant 0 : i32
    %c0_i32_0 = arith.constant 0 : i32
    return %arg0, %c0_i32 : i32, i32
  }
  func.func @transform_1(%arg0: i32) -> (i32, i32, i32) {
    %c0_i32 = arith.constant 0 : i32
    %c0_i32_0 = arith.constant 0 : i32
    %c0_i32_1 = arith.constant 0 : i32
    %c0_i32_2 = arith.constant 0 : i32
    return %c0_i32, %c0_i32_0, %c0_i32_1 : i32, i32, i32
  }
  func.func @transform_2(%arg0: i32) -> i32 {
    %c0_i32 = arith.constant 0 : i32
    %c0_i32_0 = arith.constant 0 : i32
    return %c0_i32 : i32
  }
  func.func @transform_3(%arg0: i32) -> (i32, i32) {
    %c0_i32 = arith.constant 0 : i32
    %c0_i32_0 = arith.constant 0 : i32
    return %arg0, %c0_i32 : i32, i32
  }
}

</mosaic_0001>

<llo_original>
// kernel: tpu_custom_call.1
$region0: #{tpu_custom_call.1}
  #allocation0 [shape = 'u32[]', space=smem, size = 0x4, offset = 0x4, fixed_abs, tag = 'smem constant byte address 0x4 - core index']
  #allocation1 [shape = 'u32[144,128]{1,0:T(1,128)}', space=vmem, size = 0x12000, scoped, tag = 'internal scratch']
  #allocation2 [shape = 'f32[1]{0:T(128)S(6)}', space=smem, size = 0x200, scoped, tag = 'scoped memory for tpu_custom_call.1']
  %s0 = inlined_call_operand.hbm [shape: f32[2,1024], index: 0, kind: input, shape index: {}]
  %s1 = inlined_call_operand.hbm [shape: f32[98,2,256], index: 1, kind: input, shape index: {}]
  %s2 = inlined_call_operand.<no memory space> [shape: f32[1], index: 2, kind: input, shape index: {}]
  %s3 = inlined_call_operand.hbm [shape: f32[2,256], index: 3, kind: output, shape index: {}]
  %s4 = sld [smem:[#allocation0]]
  $region30: #{tpu_custom_call.1} parent=0
    _
  %s6 = ssub.s32 1, %s4
  %s7 = scalar_select 0, %s6, %s4
  %8 = sst [smem:[#allocation2]] %s2
  $region1: #{tpu_custom_call.1} parent=0
    #allocation3 [shape = 'u8[8192]{0}', space=vmem, size = 0x2000, scoped, tag = 'input window, operand 0, single buffered']
    #allocation4 [shape = 's32[1]{0}', space=sflag, size = 0x4, scoped, tag = 'scoped memory for tpu_custom_call.1']
    #allocation5 [shape = 's32[1]{0}', space=sflag, size = 0x4, scoped, tag = 'scoped memory for tpu_custom_call.1']
    #allocation6 [shape = 'u8[200704]{0}', space=vmem, size = 0x31000, scoped, tag = 'input window, operand 1, single buffered']
    #allocation7 [shape = 's32[1]{0}', space=sflag, size = 0x4, scoped, tag = 'scoped memory for tpu_custom_call.1']
    #allocation8 [shape = 'u8[2048]{0}', space=vmem, size = 0x800, scoped, tag = 'output window, operand 0, single buffered']
    %9 = vsyncpa [#allocation4], 0
    %10 = vsyncpa [#allocation7], 0
    %11 = vsyncpa [#allocation5], 0
    // Predicated region
    $region2: #{tpu_custom_call.1} parent=1 // pred_check
      _
    $region3: #{tpu_custom_call.1} parent=1 // pred_check_branch
      %13 = sbr.rel (0) target = $region5
    $region4: #{tpu_custom_call.1} parent=1 // pred_region
      %s15 = ssub.s32 256, 256
      %16 = vsyncadd [#allocation4], %s15
      %s18 = sshll.u32 [#allocation3], 4
      %s19 = int_to_ptr.vmem [resolvable:$true] %s18
      %21 = dma.hbm_to_vmem [thread:$0]  %s0, 256, %s19, [#allocation4]
    $region5: #{tpu_custom_call.1} parent=1 // pred_fallthru
      _
    // Predicated region
    $region6: #{tpu_custom_call.1} parent=1 // pred_check
      _
    $region7: #{tpu_custom_call.1} parent=1 // pred_check_branch
      %23 = sbr.rel (0) target = $region9
    $region8: #{tpu_custom_call.1} parent=1 // pred_region
      %s25 = ssub.s32 6272, 6272
      %26 = vsyncadd [#allocation7], %s25
      %s27 = sshll.u32 [#allocation6], 4
      %s28 = int_to_ptr.vmem [resolvable:$true] %s27
      %33 = dma.hbm_to_vmem [thread:$0]  %s1, 6272, %s28, [#allocation7], 64, 64, 4
    $region9: #{tpu_custom_call.1} parent=1 // pred_fallthru
      _
    // Predicated region
    $region10: #{tpu_custom_call.1} parent=1 // pred_check
      _
    $region11: #{tpu_custom_call.1} parent=1 // pred_check_branch
      %35 = sbr.rel (0) target = $region13
    $region12: #{tpu_custom_call.1} parent=1 // pred_region
      _
    $region13: #{tpu_custom_call.1} parent=1 // pred_fallthru
      _
    // Predicated region
    $region14: #{tpu_custom_call.1} parent=1 // pred_check
      _
    $region15: #{tpu_custom_call.1} parent=1 // pred_check_branch
      %37 = sbr.rel (0) target = $region17
    $region16: #{tpu_custom_call.1} parent=1 // pred_region
      %38 = dma.done [#allocation4], 256
    $region17: #{tpu_custom_call.1} parent=1 // pred_fallthru
      _
    // Predicated region
    $region18: #{tpu_custom_call.1} parent=1 // pred_check
      _
    $region19: #{tpu_custom_call.1} parent=1 // pred_check_branch
      %40 = sbr.rel (0) target = $region21
    $region20: #{tpu_custom_call.1} parent=1 // pred_region
      %41 = dma.done [#allocation7], 6272
    $region21: #{tpu_custom_call.1} parent=1 // pred_fallthru
      _
    %s42 = sld [smem:[#allocation2]]
    %v43 = vld [vmem:[#allocation3] sm:$0xf]
    %v44 = vld [vmem:[#allocation3 + $0x4] sm:$0xf]
    %v45 = vmax.f32 %v43, %v44
    %v46 = vadd.f32 %v43, %v44
    %v47 = vld [vmem:[#allocation3 + $0x8] sm:$0xf]
    %v48 = vmax.f32 %v45, %v47
    %v49 = vadd.f32 %v46, %v47
    %v50 = vld [vmem:[#allocation3 + $0xc] sm:$0xf]
    %v51 = vmax.f32 %v48, %v50
    %v52 = vadd.f32 %v49, %v50
    %v53 = vmul.f32 %v52, 0.25
    %v54 = vstv %s42
    %v55 = vadd.f32 %v54, 0.0
    %v58 = vunpack.c.l.s4 1983009808
    %v59 = vunpack.c.0.s8 %v58
    %v60 = vlaneseq
    %v61 = vshrl.u32 %v60, 7
    %v62 = vsub.s32 %v59, %v61
    %v63 = vrot.slane %v51, %v62
    %v64 = vcombine.high %v63, %v63
    %67 = vrot.lane.b32.xlu0 %v63, 51
    %v68 = vpop.permute.xlu0 %67
    %69 = vrot.lane.b32.xlu0 %v64, 51
    %v70 = vpop.permute.xlu0 %69
    %v71 = vlaneseq
    %v72 = vand.u32 %v71, 127
    %vm73 = vcmp.lt.s32.totalorder %v72, 51
    %v74 = vsel %vm73, %v68, %v70
    %v75 = vsel %vm73, %v70, %v68
    %v78 = vunpack.c.l.s4 1983009808
    %v79 = vunpack.c.0.s8 %v78
    %v80 = vlaneseq
    %v81 = vshrl.u32 %v80, 7
    %v82 = vsub.s32 %v79, %v81
    %v83 = vrot.slane %v53, %v82
    %v84 = vcombine.high %v83, %v83
    %87 = vrot.lane.b32.xlu0 %v83, 51
    %v88 = vpop.permute.xlu0 %87
    %89 = vrot.lane.b32.xlu0 %v84, 51
    %v90 = vpop.permute.xlu0 %89
    %v91 = vsel %vm73, %v88, %v90
    %v92 = vsel %vm73, %v90, %v88
    %v93 = vld [vmem:[#allocation6] sm:$0xf]
    %v96 = vunpack.c.l.s4 1983009808
    %v97 = vunpack.c.0.s8 %v96
    %v98 = vlaneseq
    %v99 = vshrl.u32 %v98, 7
    %v100 = vsub.s32 %v97, %v99
    %v101 = vrot.slane %v93, %v100
    %v102 = vcombine.high %v101, %v101
    %v105 = vmul.f32 %v75, %v101
    %v106 = vmul.f32 %v74, %v102
    %v107 = vadd.f32 %v55, %v105
    %v108 = vadd.f32 %v55, %v106
    %s109 = scalar_lea.vmem [#allocation6], 196
    %v110 = vld [vmem:[%s109] sm:$0xf]
    %v113 = vunpack.c.l.s4 1983009808
    %v114 = vunpack.c.0.s8 %v113
    %v115 = vlaneseq
    %v116 = vshrl.u32 %v115, 7
    %v117 = vsub.s32 %v114, %v116
    %v118 = vrot.slane %v110, %v117
    %v119 = vcombine.high %v118, %v118
    %v122 = vmul.f32 %v92, %v118
    %v123 = vmul.f32 %v91, %v119
    %v124 = vadd.f32 %v107, %v122
    %v125 = vadd.f32 %v108, %v123
    %126 = vrot.lane.b32.xlu0 %v63, 50
    %v127 = vpop.permute.xlu0 %126
    %128 = vrot.lane.b32.xlu0 %v64, 50
    %v129 = vpop.permute.xlu0 %128
    %vm130 = vcmp.lt.s32.totalorder %v72, 50
    %v131 = vsel %vm130, %v127, %v129
    %v132 = vsel %vm130, %v129, %v127
    %133 = vrot.lane.b32.xlu0 %v83, 50
    %v134 = vpop.permute.xlu0 %133
    %135 = vrot.lane.b32.xlu0 %v84, 50
    %v136 = vpop.permute.xlu0 %135
    %v137 = vsel %vm130, %v134, %v136
    %v138 = vsel %vm130, %v136, %v134
    %s139 = scalar_lea.vmem [#allocation6], 4
    %v140 = vld [vmem:[%s139] sm:$0xf]
    %v143 = vunpack.c.l.s4 1983009808
    %v144 = vunpack.c.0.s8 %v143
    %v145 = vlaneseq
    %v146 = vshrl.u32 %v145, 7
    %v147 = vsub.s32 %v144, %v146
    %v148 = vrot.slane %v140, %v147
    %v149 = vcombine.high %v148, %v148
    %v152 = vmul.f32 %v132, %v148
    %v153 = vmul.f32 %v131, %v149
    %v154 = vadd.f32 %v124, %v152
    %v155 = vadd.f32 %v125, %v153
    %s156 = scalar_lea.vmem [#allocation6], 200
    %v157 = vld [vmem:[%s156] sm:$0xf]
    %v160 = vunpack.c.l.s4 1983009808
    %v161 = vunpack.c.0.s8 %v160
    %v162 = vlaneseq
    %v163 = vshrl.u32 %v162, 7
    %v164 = vsub.s32 %v161, %v163
    %v165 = vrot.slane %v157, %v164
    %v166 = vcombine.high %v165, %v165
    %v169 = vmul.f32 %v138, %v165
    %v170 = vmul.f32 %v137, %v166
    %v171 = vadd.f32 %v154, %v169
    %v172 = vadd.f32 %v155, %v170
    %173 = vrot.lane.b32.xlu0 %v63, 49
    %v174 = vpop.permute.xlu0 %173
    %175 = vrot.lane.b32.xlu0 %v64, 49
    %v176 = vpop.permute.xlu0 %175
    %vm177 = vcmp.lt.s32.totalorder %v72, 49
    %v178 = vsel %vm177, %v174, %v176
    %v179 = vsel %vm177, %v176, %v174
    %180 = vrot.lane.b32.xlu0 %v83, 49
    %v181 = vpop.permute.xlu0 %180
    %182 = vrot.lane.b32.xlu0 %v84, 49
    %v183 = vpop.permute.xlu0 %182
    %v184 = vsel %vm177, %v181, %v183
    %v185 = vsel %vm177, %v183, %v181
    %s186 = scalar_lea.vmem [#allocation6], 8
    %v187 = vld [vmem:[%s186] sm:$0xf]
    %v190 = vunpack.c.l.s4 1983009808
    %v191 = vunpack.c.0.s8 %v190
    %v192 = vlaneseq
    %v193 = vshrl.u32 %v192, 7
    %v194 = vsub.s32 %v191, %v193
    %v195 = vrot.slane %v187, %v194
    %v196 = vcombine.high %v195, %v195
    %v199 = vmul.f32 %v179, %v195
    %v200 = vmul.f32 %v178, %v196
    %v201 = vadd.f32 %v171, %v199
    %v202 = vadd.f32 %v172, %v200
    %s203 = scalar_lea.vmem [#allocation6], 204
    %v204 = vld [vmem:[%s203] sm:$0xf]
    %v207 = vunpack.c.l.s4 1983009808
    %v208 = vunpack.c.0.s8 %v207
    %v209 = vlaneseq
    %v210 = vshrl.u32 %v209, 7
    %v211 = vsub.s32 %v208, %v210
    %v212 = vrot.slane %v204, %v211
    %v213 = vcombine.high %v212, %v212
    %v216 = vmul.f32 %v185, %v212
    %v217 = vmul.f32 %v184, %v213
    %v218 = vadd.f32 %v201, %v216
    %v219 = vadd.f32 %v202, %v217
    %220 = vrot.lane.b32.xlu0 %v63, 48
    %v221 = vpop.permute.xlu0 %220
    %222 = vrot.lane.b32.xlu0 %v64, 48
    %v223 = vpop.permute.xlu0 %222
    %vm224 = vcmp.lt.s32.totalorder %v72, 48
    %v225 = vsel %vm224, %v221, %v223
    %v226 = vsel %vm224, %v223, %v221
    %227 = vrot.lane.b32.xlu0 %v83, 48
    %v228 = vpop.permute.xlu0 %227
    %229 = vrot.lane.b32.xlu0 %v84, 48
    %v230 = vpop.permute.xlu0 %229
    %v231 = vsel %vm224, %v228, %v230
    %v232 = vsel %vm224, %v230, %v228
    %s233 = scalar_lea.vmem [#allocation6], 12
    %v234 = vld [vmem:[%s233] sm:$0xf]
    %v237 = vunpack.c.l.s4 1983009808
    %v238 = vunpack.c.0.s8 %v237
    %v239 = vlaneseq
    %v240 = vshrl.u32 %v239, 7
    %v241 = vsub.s32 %v238, %v240
    %v242 = vrot.slane %v234, %v241
    %v243 = vcombine.high %v242, %v242
    %v246 = vmul.f32 %v226, %v242
    %v247 = vmul.f32 %v225, %v243
    %v248 = vadd.f32 %v218, %v246
    %v249 = vadd.f32 %v219, %v247
    %s250 = scalar_lea.vmem [#allocation6], 208
    %v251 = vld [vmem:[%s250] sm:$0xf]
    %v254 = vunpack.c.l.s4 1983009808
    %v255 = vunpack.c.0.s8 %v254
    %v256 = vlaneseq
    %v257 = vshrl.u32 %v256, 7
    %v258 = vsub.s32 %v255, %v257
    %v259 = vrot.slane %v251, %v258
    %v260 = vcombine.high %v259, %v259
    %v263 = vmul.f32 %v232, %v259
    %v264 = vmul.f32 %v231, %v260
    %v265 = vadd.f32 %v248, %v263
    %v266 = vadd.f32 %v249, %v264
    %267 = vrot.lane.b32.xlu0 %v63, 47
    %v268 = vpop.permute.xlu0 %267
    %269 = vrot.lane.b32.xlu0 %v64, 47
    %v270 = vpop.permute.xlu0 %269
    %vm271 = vcmp.lt.s32.totalorder %v72, 47
    %v272 = vsel %vm271, %v268, %v270
    %v273 = vsel %vm271, %v270, %v268
    %274 = vrot.lane.b32.xlu0 %v83, 47
    %v275 = vpop.permute.xlu0 %274
    %276 = vrot.lane.b32.xlu0 %v84, 47
    %v277 = vpop.permute.xlu0 %276
    %v278 = vsel %vm271, %v275, %v277
    %v279 = vsel %vm271, %v277, %v275
    %s280 = scalar_lea.vmem [#allocation6], 16
    %v281 = vld [vmem:[%s280] sm:$0xf]
    %v284 = vunpack.c.l.s4 1983009808
    %v285 = vunpack.c.0.s8 %v284
    %v286 = vlaneseq
    %v287 = vshrl.u32 %v286, 7
    %v288 = vsub.s32 %v285, %v287
    %v289 = vrot.slane %v281, %v288
    %v290 = vcombine.high %v289, %v289
    %v293 = vmul.f32 %v273, %v289
    %v294 = vmul.f32 %v272, %v290
    %v295 = vadd.f32 %v265, %v293
    %v296 = vadd.f32 %v266, %v294
    %s297 = scalar_lea.vmem [#allocation6], 212
    %v298 = vld [vmem:[%s297] sm:$0xf]
    %v301 = vunpack.c.l.s4 1983009808
    %v302 = vunpack.c.0.s8 %v301
    %v303 = vlaneseq
    %v304 = vshrl.u32 %v303, 7
    %v305 = vsub.s32 %v302, %v304
    %v306 = vrot.slane %v298, %v305
    %v307 = vcombine.high %v306, %v306
    %v310 = vmul.f32 %v279, %v306
    %v311 = vmul.f32 %v278, %v307
    %v312 = vadd.f32 %v295, %v310
    %v313 = vadd.f32 %v296, %v311
    %314 = vrot.lane.b32.xlu0 %v63, 46
    %v315 = vpop.permute.xlu0 %314
    %316 = vrot.lane.b32.xlu0 %v64, 46
    %v317 = vpop.permute.xlu0 %316
    %vm318 = vcmp.lt.s32.totalorder %v72, 46
    %v319 = vsel %vm318, %v315, %v317
    %v320 = vsel %vm318, %v317, %v315
    %321 = vrot.lane.b32.xlu0 %v83, 46
    %v322 = vpop.permute.xlu0 %321
    %323 = vrot.lane.b32.xlu0 %v84, 46
    %v324 = vpop.permute.xlu0 %323
    %v325 = vsel %vm318, %v322, %v324
    %v326 = vsel %vm318, %v324, %v322
    %s327 = scalar_lea.vmem [#allocation6], 20
    %v328 = vld [vmem:[%s327] sm:$0xf]
    %v331 = vunpack.c.l.s4 1983009808
    %v332 = vunpack.c.0.s8 %v331
    %v333 = vlaneseq
    %v334 = vshrl.u32 %v333, 7
    %v335 = vsub.s32 %v332, %v334
    %v336 = vrot.slane %v328, %v335
    %v337 = vcombine.high %v336, %v336
    %v340 = vmul.f32 %v320, %v336
    %v341 = vmul.f32 %v319, %v337
    %v342 = vadd.f32 %v312, %v340
    %v343 = vadd.f32 %v313, %v341
    %s344 = scalar_lea.vmem [#allocation6], 216
    %v345 = vld [vmem:[%s344] sm:$0xf]
    %v348 = vunpack.c.l.s4 1983009808
    %v349 = vunpack.c.0.s8 %v348
    %v350 = vlaneseq
    %v351 = vshrl.u32 %v350, 7
    %v352 = vsub.s32 %v349, %v351
    %v353 = vrot.slane %v345, %v352
    %v354 = vcombine.high %v353, %v353
    %v357 = vmul.f32 %v326, %v353
    %v358 = vmul.f32 %v325, %v354
    %v359 = vadd.f32 %v342, %v357
    %v360 = vadd.f32 %v343, %v358
    %361 = vrot.lane.b32.xlu0 %v63, 45
    %v362 = vpop.permute.xlu0 %361
    %363 = vrot.lane.b32.xlu0 %v64, 45
    %v364 = vpop.permute.xlu0 %363
    %vm365 = vcmp.lt.s32.totalorder %v72, 45
    %v366 = vsel %vm365, %v362, %v364
    %v367 = vsel %vm365, %v364, %v362
    %368 = vrot.lane.b32.xlu0 %v83, 45
    %v369 = vpop.permute.xlu0 %368
    %370 = vrot.lane.b32.xlu0 %v84, 45
    %v371 = vpop.permute.xlu0 %370
    %v372 = vsel %vm365, %v369, %v371
    %v373 = vsel %vm365, %v371, %v369
    %s374 = scalar_lea.vmem [#allocation6], 24
    %v375 = vld [vmem:[%s374] sm:$0xf]
    %v378 = vunpack.c.l.s4 1983009808
    %v379 = vunpack.c.0.s8 %v378
    %v380 = vlaneseq
    %v381 = vshrl.u32 %v380, 7
    %v382 = vsub.s32 %v379, %v381
    %v383 = vrot.slane %v375, %v382
    %v384 = vcombine.high %v383, %v383
    %v387 = vmul.f32 %v367, %v383
    %v388 = vmul.f32 %v366, %v384
    %v389 = vadd.f32 %v359, %v387
    %v390 = vadd.f32 %v360, %v388
    %s391 = scalar_lea.vmem [#allocation6], 220
    %v392 = vld [vmem:[%s391] sm:$0xf]
    %v395 = vunpack.c.l.s4 1983009808
    %v396 = vunpack.c.0.s8 %v395
    %v397 = vlaneseq
    %v398 = vshrl.u32 %v397, 7
    %v399 = vsub.s32 %v396, %v398
    %v400 = vrot.slane %v392, %v399
    %v401 = vcombine.high %v400, %v400
    %v404 = vmul.f32 %v373, %v400
    %v405 = vmul.f32 %v372, %v401
    %v406 = vadd.f32 %v389, %v404
    %v407 = vadd.f32 %v390, %v405
    %408 = vrot.lane.b32.xlu0 %v63, 35
    %v409 = vpop.permute.xlu0 %408
    %410 = vrot.lane.b32.xlu0 %v64, 35
    %v411 = vpop.permute.xlu0 %410
    %vm412 = vcmp.lt.s32.totalorder %v72, 35
    %v413 = vsel %vm412, %v409, %v411
    %v414 = vsel %vm412, %v411, %v409
    %415 = vrot.lane.b32.xlu0 %v83, 35
    %v416 = vpop.permute.xlu0 %415
    %417 = vrot.lane.b32.xlu0 %v84, 35
    %v418 = vpop.permute.xlu0 %417
    %v419 = vsel %vm412, %v416, %v418
    %v420 = vsel %vm412, %v418, %v416
    %s421 = scalar_lea.vmem [#allocation6], 28
    %v422 = vld [vmem:[%s421] sm:$0xf]
    %v425 = vunpack.c.l.s4 1983009808
    %v426 = vunpack.c.0.s8 %v425
    %v427 = vlaneseq
    %v428 = vshrl.u32 %v427, 7
    %v429 = vsub.s32 %v426, %v428
    %v430 = vrot.slane %v422, %v429
    %v431 = vcombine.high %v430, %v430
    %v434 = vmul.f32 %v414, %v430
    %v435 = vmul.f32 %v413, %v431
    %v436 = vadd.f32 %v406, %v434
    %v437 = vadd.f32 %v407, %v435
    %s438 = scalar_lea.vmem [#allocation6], 224
    %v439 = vld [vmem:[%s438] sm:$0xf]
    %v442 = vunpack.c.l.s4 1983009808
    %v443 = vunpack.c.0.s8 %v442
    %v444 = vlaneseq
    %v445 = vshrl.u32 %v444, 7
    %v446 = vsub.s32 %v443, %v445
    %v447 = vrot.slane %v439, %v446
    %v448 = vcombine.high %v447, %v447
    %v451 = vmul.f32 %v420, %v447
    %v452 = vmul.f32 %v419, %v448
    %v453 = vadd.f32 %v436, %v451
    %v454 = vadd.f32 %v437, %v452
    %455 = vrot.lane.b32.xlu0 %v63, 34
    %v456 = vpop.permute.xlu0 %455
    %457 = vrot.lane.b32.xlu0 %v64, 34
    %v458 = vpop.permute.xlu0 %457
    %vm459 = vcmp.lt.s32.totalorder %v72, 34
    %v460 = vsel %vm459, %v456, %v458
    %v461 = vsel %vm459, %v458, %v456
    %462 = vrot.lane.b32.xlu0 %v83, 34
    %v463 = vpop.permute.xlu0 %462
    %464 = vrot.lane.b32.xlu0 %v84, 34
    %v465 = vpop.permute.xlu0 %464
    %v466 = vsel %vm459, %v463, %v465
    %v467 = vsel %vm459, %v465, %v463
    %s468 = scalar_lea.vmem [#allocation6], 32
    %v469 = vld [vmem:[%s468] sm:$0xf]
    %v472 = vunpack.c.l.s4 1983009808
    %v473 = vunpack.c.0.s8 %v472
    %v474 = vlaneseq
    %v475 = vshrl.u32 %v474, 7
    %v476 = vsub.s32 %v473, %v475
    %v477 = vrot.slane %v469, %v476
    %v478 = vcombine.high %v477, %v477
    %v481 = vmul.f32 %v461, %v477
    %v482 = vmul.f32 %v460, %v478
    %v483 = vadd.f32 %v453, %v481
    %v484 = vadd.f32 %v454, %v482
    %s485 = scalar_lea.vmem [#allocation6], 228
    %v486 = vld [vmem:[%s485] sm:$0xf]
    %v489 = vunpack.c.l.s4 1983009808
    %v490 = vunpack.c.0.s8 %v489
    %v491 = vlaneseq
    %v492 = vshrl.u32 %v491, 7
    %v493 = vsub.s32 %v490, %v492
    %v494 = vrot.slane %v486, %v493
    %v495 = vcombine.high %v494, %v494
    %v498 = vmul.f32 %v467, %v494
    %v499 = vmul.f32 %v466, %v495
    %v500 = vadd.f32 %v483, %v498
    %v501 = vadd.f32 %v484, %v499
    %502 = vrot.lane.b32.xlu0 %v63, 33
    %v503 = vpop.permute.xlu0 %502
    %504 = vrot.lane.b32.xlu0 %v64, 33
    %v505 = vpop.permute.xlu0 %504
    %vm506 = vcmp.lt.s32.totalorder %v72, 33
    %v507 = vsel %vm506, %v503, %v505
    %v508 = vsel %vm506, %v505, %v503
    %509 = vrot.lane.b32.xlu0 %v83, 33
    %v510 = vpop.permute.xlu0 %509
    %511 = vrot.lane.b32.xlu0 %v84, 33
    %v512 = vpop.permute.xlu0 %511
    %v513 = vsel %vm506, %v510, %v512
    %v514 = vsel %vm506, %v512, %v510
    %s515 = scalar_lea.vmem [#allocation6], 36
    %v516 = vld [vmem:[%s515] sm:$0xf]
    %v519 = vunpack.c.l.s4 1983009808
    %v520 = vunpack.c.0.s8 %v519
    %v521 = vlaneseq
    %v522 = vshrl.u32 %v521, 7
    %v523 = vsub.s32 %v520, %v522
    %v524 = vrot.slane %v516, %v523
    %v525 = vcombine.high %v524, %v524
    %v528 = vmul.f32 %v508, %v524
    %v529 = vmul.f32 %v507, %v525
    %v530 = vadd.f32 %v500, %v528
    %v531 = vadd.f32 %v501, %v529
    %s532 = scalar_lea.vmem [#allocation6], 232
    %v533 = vld [vmem:[%s532] sm:$0xf]
    %v536 = vunpack.c.l.s4 1983009808
    %v537 = vunpack.c.0.s8 %v536
    %v538 = vlaneseq
    %v539 = vshrl.u32 %v538, 7
    %v540 = vsub.s32 %v537, %v539
    %v541 = vrot.slane %v533, %v540
    %v542 = vcombine.high %v541, %v541
    %v545 = vmul.f32 %v514, %v541
    %v546 = vmul.f32 %v513, %v542
    %v547 = vadd.f32 %v530, %v545
    %v548 = vadd.f32 %v531, %v546
    %549 = vrot.lane.b32.xlu0 %v63, 32
    %v550 = vpop.permute.xlu0 %549
    %551 = vrot.lane.b32.xlu0 %v64, 32
    %v552 = vpop.permute.xlu0 %551
    %vm553 = vcmp.lt.s32.totalorder %v72, 32
    %v554 = vsel %vm553, %v550, %v552
    %v555 = vsel %vm553, %v552, %v550
    %556 = vrot.lane.b32.xlu0 %v83, 32
    %v557 = vpop.permute.xlu0 %556
    %558 = vrot.lane.b32.xlu0 %v84, 32
    %v559 = vpop.permute.xlu0 %558
    %v560 = vsel %vm553, %v557, %v559
    %v561 = vsel %vm553, %v559, %v557
    %s562 = scalar_lea.vmem [#allocation6], 40
    %v563 = vld [vmem:[%s562] sm:$0xf]
    %v566 = vunpack.c.l.s4 1983009808
    %v567 = vunpack.c.0.s8 %v566
    %v568 = vlaneseq
    %v569 = vshrl.u32 %v568, 7
    %v570 = vsub.s32 %v567, %v569
    %v571 = vrot.slane %v563, %v570
    %v572 = vcombine.high %v571, %v571
    %v575 = vmul.f32 %v555, %v571
    %v576 = vmul.f32 %v554, %v572
    %v577 = vadd.f32 %v547, %v575
    %v578 = vadd.f32 %v548, %v576
    %s579 = scalar_lea.vmem [#allocation6], 236
    %v580 = vld [vmem:[%s579] sm:$0xf]
    %v583 = vunpack.c.l.s4 1983009808
    %v584 = vunpack.c.0.s8 %v583
    %v585 = vlaneseq
    %v586 = vshrl.u32 %v585, 7
    %v587 = vsub.s32 %v584, %v586
    %v588 = vrot.slane %v580, %v587
    %v589 = vcombine.high %v588, %v588
    %v592 = vmul.f32 %v561, %v588
    %v593 = vmul.f32 %v560, %v589
    %v594 = vadd.f32 %v577, %v592
    %v595 = vadd.f32 %v578, %v593
    %596 = vrot.lane.b32.xlu0 %v63, 31
    %v597 = vpop.permute.xlu0 %596
    %598 = vrot.lane.b32.xlu0 %v64, 31
    %v599 = vpop.permute.xlu0 %598
    %vm600 = vcmp.lt.s32.totalorder %v72, 31
    %v601 = vsel %vm600, %v597, %v599
    %v602 = vsel %vm600, %v599, %v597
    %603 = vrot.lane.b32.xlu0 %v83, 31
    %v604 = vpop.permute.xlu0 %603
    %605 = vrot.lane.b32.xlu0 %v84, 31
    %v606 = vpop.permute.xlu0 %605
    %v607 = vsel %vm600, %v604, %v606
    %v608 = vsel %vm600, %v606, %v604
    %s609 = scalar_lea.vmem [#allocation6], 44
    %v610 = vld [vmem:[%s609] sm:$0xf]
    %v613 = vunpack.c.l.s4 1983009808
    %v614 = vunpack.c.0.s8 %v613
    %v615 = vlaneseq
    %v616 = vshrl.u32 %v615, 7
    %v617 = vsub.s32 %v614, %v616
    %v618 = vrot.slane %v610, %v617
    %v619 = vcombine.high %v618, %v618
    %v622 = vmul.f32 %v602, %v618
    %v623 = vmul.f32 %v601, %v619
    %v624 = vadd.f32 %v594, %v622
    %v625 = vadd.f32 %v595, %v623
    %s626 = scalar_lea.vmem [#allocation6], 240
    %v627 = vld [vmem:[%s626] sm:$0xf]
    %v630 = vunpack.c.l.s4 1983009808
    %v631 = vunpack.c.0.s8 %v630
    %v632 = vlaneseq
    %v633 = vshrl.u32 %v632, 7
    %v634 = vsub.s32 %v631, %v633
    %v635 = vrot.slane %v627, %v634
    %v636 = vcombine.high %v635, %v635
    %v639 = vmul.f32 %v608, %v635
    %v640 = vmul.f32 %v607, %v636
    %v641 = vadd.f32 %v624, %v639
    %v642 = vadd.f32 %v625, %v640
    %643 = vrot.lane.b32.xlu0 %v63, 30
    %v644 = vpop.permute.xlu0 %643
    %645 = vrot.lane.b32.xlu0 %v64, 30
    %v646 = vpop.permute.xlu0 %645
    %vm647 = vcmp.lt.s32.totalorder %v72, 30
    %v648 = vsel %vm647, %v644, %v646
    %v649 = vsel %vm647, %v646, %v644
    %650 = vrot.lane.b32.xlu0 %v83, 30
    %v651 = vpop.permute.xlu0 %650
    %652 = vrot.lane.b32.xlu0 %v84, 30
    %v653 = vpop.permute.xlu0 %652
    %v654 = vsel %vm647, %v651, %v653
    %v655 = vsel %vm647, %v653, %v651
    %s656 = scalar_lea.vmem [#allocation6], 48
    %v657 = vld [vmem:[%s656] sm:$0xf]
    %v660 = vunpack.c.l.s4 1983009808
    %v661 = vunpack.c.0.s8 %v660
    %v662 = vlaneseq
    %v663 = vshrl.u32 %v662, 7
    %v664 = vsub.s32 %v661, %v663
    %v665 = vrot.slane %v657, %v664
    %v666 = vcombine.high %v665, %v665
    %v669 = vmul.f32 %v649, %v665
    %v670 = vmul.f32 %v648, %v666
    %v671 = vadd.f32 %v641, %v669
    %v672 = vadd.f32 %v642, %v670
    %s673 = scalar_lea.vmem [#allocation6], 244
    %v674 = vld [vmem:[%s673] sm:$0xf]
    %v677 = vunpack.c.l.s4 1983009808
    %v678 = vunpack.c.0.s8 %v677
    %v679 = vlaneseq
    %v680 = vshrl.u32 %v679, 7
    %v681 = vsub.s32 %v678, %v680
    %v682 = vrot.slane %v674, %v681
    %v683 = vcombine.high %v682, %v682
    %v686 = vmul.f32 %v655, %v682
    %v687 = vmul.f32 %v654, %v683
    %v688 = vadd.f32 %v671, %v686
    %v689 = vadd.f32 %v672, %v687
    %690 = vrot.lane.b32.xlu0 %v63, 29
    %v691 = vpop.permute.xlu0 %690
    %692 = vrot.lane.b32.xlu0 %v64, 29
    %v693 = vpop.permute.xlu0 %692
    %vm694 = vcmp.lt.s32.totalorder %v72, 29
    %v695 = vsel %vm694, %v691, %v693
    %v696 = vsel %vm694, %v693, %v691
    %697 = vrot.lane.b32.xlu0 %v83, 29
    %v698 = vpop.permute.xlu0 %697
    %699 = vrot.lane.b32.xlu0 %v84, 29
    %v700 = vpop.permute.xlu0 %699
    %v701 = vsel %vm694, %v698, %v700
    %v702 = vsel %vm694, %v700, %v698
    %s703 = scalar_lea.vmem [#allocation6], 52
    %v704 = vld [vmem:[%s703] sm:$0xf]
    %v707 = vunpack.c.l.s4 1983009808
    %v708 = vunpack.c.0.s8 %v707
    %v709 = vlaneseq
    %v710 = vshrl.u32 %v709, 7
    %v711 = vsub.s32 %v708, %v710
    %v712 = vrot.slane %v704, %v711
    %v713 = vcombine.high %v712, %v712
    %v716 = vmul.f32 %v696, %v712
    %v717 = vmul.f32 %v695, %v713
    %v718 = vadd.f32 %v688, %v716
    %v719 = vadd.f32 %v689, %v717
    %s720 = scalar_lea.vmem [#allocation6], 248
    %v721 = vld [vmem:[%s720] sm:$0xf]
    %v724 = vunpack.c.l.s4 1983009808
    %v725 = vunpack.c.0.s8 %v724
    %v726 = vlaneseq
    %v727 = vshrl.u32 %v726, 7
    %v728 = vsub.s32 %v725, %v727
    %v729 = vrot.slane %v721, %v728
    %v730 = vcombine.high %v729, %v729
    %v733 = vmul.f32 %v702, %v729
    %v734 = vmul.f32 %v701, %v730
    %v735 = vadd.f32 %v718, %v733
    %v736 = vadd.f32 %v719, %v734
    %737 = vrot.lane.b32.xlu0 %v63, 19
    %v738 = vpop.permute.xlu0 %737
    %739 = vrot.lane.b32.xlu0 %v64, 19
    %v740 = vpop.permute.xlu0 %739
    %vm741 = vcmp.lt.s32.totalorder %v72, 19
    %v742 = vsel %vm741, %v738, %v740
    %v743 = vsel %vm741, %v740, %v738
    %744 = vrot.lane.b32.xlu0 %v83, 19
    %v745 = vpop.permute.xlu0 %744
    %746 = vrot.lane.b32.xlu0 %v84, 19
    %v747 = vpop.permute.xlu0 %746
    %v748 = vsel %vm741, %v745, %v747
    %v749 = vsel %vm741, %v747, %v745
    %s750 = scalar_lea.vmem [#allocation6], 56
    %v751 = vld [vmem:[%s750] sm:$0xf]
    %v754 = vunpack.c.l.s4 1983009808
    %v755 = vunpack.c.0.s8 %v754
    %v756 = vlaneseq
    %v757 = vshrl.u32 %v756, 7
    %v758 = vsub.s32 %v755, %v757
    %v759 = vrot.slane %v751, %v758
    %v760 = vcombine.high %v759, %v759
    %v763 = vmul.f32 %v743, %v759
    %v764 = vmul.f32 %v742, %v760
    %v765 = vadd.f32 %v735, %v763
    %v766 = vadd.f32 %v736, %v764
    %s767 = scalar_lea.vmem [#allocation6], 252
    %v768 = vld [vmem:[%s767] sm:$0xf]
    %v771 = vunpack.c.l.s4 1983009808
    %v772 = vunpack.c.0.s8 %v771
    %v773 = vlaneseq
    %v774 = vshrl.u32 %v773, 7
    %v775 = vsub.s32 %v772, %v774
    %v776 = vrot.slane %v768, %v775
    %v777 = vcombine.high %v776, %v776
    %v780 = vmul.f32 %v749, %v776
    %v781 = vmul.f32 %v748, %v777
    %v782 = vadd.f32 %v765, %v780
    %v783 = vadd.f32 %v766, %v781
    %784 = vrot.lane.b32.xlu0 %v63, 18
    %v785 = vpop.permute.xlu0 %784
    %786 = vrot.lane.b32.xlu0 %v64, 18
    %v787 = vpop.permute.xlu0 %786
    %vm788 = vcmp.lt.s32.totalorder %v72, 18
    %v789 = vsel %vm788, %v785, %v787
    %v790 = vsel %vm788, %v787, %v785
    %791 = vrot.lane.b32.xlu0 %v83, 18
    %v792 = vpop.permute.xlu0 %791
    %793 = vrot.lane.b32.xlu0 %v84, 18
    %v794 = vpop.permute.xlu0 %793
    %v795 = vsel %vm788, %v792, %v794
    %v796 = vsel %vm788, %v794, %v792
    %s797 = scalar_lea.vmem [#allocation6], 60
    %v798 = vld [vmem:[%s797] sm:$0xf]
    %v801 = vunpack.c.l.s4 1983009808
    %v802 = vunpack.c.0.s8 %v801
    %v803 = vlaneseq
    %v804 = vshrl.u32 %v803, 7
    %v805 = vsub.s32 %v802, %v804
    %v806 = vrot.slane %v798, %v805
    %v807 = vcombine.high %v806, %v806
    %v810 = vmul.f32 %v790, %v806
    %v811 = vmul.f32 %v789, %v807
    %v812 = vadd.f32 %v782, %v810
    %v813 = vadd.f32 %v783, %v811
    %s814 = scalar_lea.vmem [#allocation6], 256
    %v815 = vld [vmem:[%s814] sm:$0xf]
    %v818 = vunpack.c.l.s4 1983009808
    %v819 = vunpack.c.0.s8 %v818
    %v820 = vlaneseq
    %v821 = vshrl.u32 %v820, 7
    %v822 = vsub.s32 %v819, %v821
    %v823 = vrot.slane %v815, %v822
    %v824 = vcombine.high %v823, %v823
    %v827 = vmul.f32 %v796, %v823
    %v828 = vmul.f32 %v795, %v824
    %v829 = vadd.f32 %v812, %v827
    %v830 = vadd.f32 %v813, %v828
    %831 = vrot.lane.b32.xlu0 %v63, 17
    %v832 = vpop.permute.xlu0 %831
    %833 = vrot.lane.b32.xlu0 %v64, 17
    %v834 = vpop.permute.xlu0 %833
    %vm835 = vcmp.lt.s32.totalorder %v72, 17
    %v836 = vsel %vm835, %v832, %v834
    %v837 = vsel %vm835, %v834, %v832
    %838 = vrot.lane.b32.xlu0 %v83, 17
    %v839 = vpop.permute.xlu0 %838
    %840 = vrot.lane.b32.xlu0 %v84, 17
    %v841 = vpop.permute.xlu0 %840
    %v842 = vsel %vm835, %v839, %v841
    %v843 = vsel %vm835, %v841, %v839
    %s844 = scalar_lea.vmem [#allocation6], 64
    %v845 = vld [vmem:[%s844] sm:$0xf]
    %v848 = vunpack.c.l.s4 1983009808
    %v849 = vunpack.c.0.s8 %v848
    %v850 = vlaneseq
    %v851 = vshrl.u32 %v850, 7
    %v852 = vsub.s32 %v849, %v851
    %v853 = vrot.slane %v845, %v852
    %v854 = vcombine.high %v853, %v853
    %v857 = vmul.f32 %v837, %v853
    %v858 = vmul.f32 %v836, %v854
    %v859 = vadd.f32 %v829, %v857
    %v860 = vadd.f32 %v830, %v858
    %s861 = scalar_lea.vmem [#allocation6], 260
    %v862 = vld [vmem:[%s861] sm:$0xf]
    %v865 = vunpack.c.l.s4 1983009808
    %v866 = vunpack.c.0.s8 %v865
    %v867 = vlaneseq
    %v868 = vshrl.u32 %v867, 7
    %v869 = vsub.s32 %v866, %v868
    %v870 = vrot.slane %v862, %v869
    %v871 = vcombine.high %v870, %v870
    %v874 = vmul.f32 %v843, %v870
    %v875 = vmul.f32 %v842, %v871
    %v876 = vadd.f32 %v859, %v874
    %v877 = vadd.f32 %v860, %v875
    %878 = vrot.lane.b32.xlu0 %v63, 16
    %v879 = vpop.permute.xlu0 %878
    %880 = vrot.lane.b32.xlu0 %v64, 16
    %v881 = vpop.permute.xlu0 %880
    %vm882 = vcmp.lt.s32.totalorder %v72, 16
    %v883 = vsel %vm882, %v879, %v881
    %v884 = vsel %vm882, %v881, %v879
    %885 = vrot.lane.b32.xlu0 %v83, 16
    %v886 = vpop.permute.xlu0 %885
    %887 = vrot.lane.b32.xlu0 %v84, 16
    %v888 = vpop.permute.xlu0 %887
    %v889 = vsel %vm882, %v886, %v888
    %v890 = vsel %vm882, %v888, %v886
    %s891 = scalar_lea.vmem [#allocation6], 68
    %v892 = vld [vmem:[%s891] sm:$0xf]
    %v895 = vunpack.c.l.s4 1983009808
    %v896 = vunpack.c.0.s8 %v895
    %v897 = vlaneseq
    %v898 = vshrl.u32 %v897, 7
    %v899 = vsub.s32 %v896, %v898
    %v900 = vrot.slane %v892, %v899
    %v901 = vcombine.high %v900, %v900
    %v904 = vmul.f32 %v884, %v900
    %v905 = vmul.f32 %v883, %v901
    %v906 = vadd.f32 %v876, %v904
    %v907 = vadd.f32 %v877, %v905
    %s908 = scalar_lea.vmem [#allocation6], 264
    %v909 = vld [vmem:[%s908] sm:$0xf]
    %v912 = vunpack.c.l.s4 1983009808
    %v913 = vunpack.c.0.s8 %v912
    %v914 = vlaneseq
    %v915 = vshrl.u32 %v914, 7
    %v916 = vsub.s32 %v913, %v915
    %v917 = vrot.slane %v909, %v916
    %v918 = vcombine.high %v917, %v917
    %v921 = vmul.f32 %v890, %v917
    %v922 = vmul.f32 %v889, %v918
    %v923 = vadd.f32 %v906, %v921
    %v924 = vadd.f32 %v907, %v922
    %925 = vrot.lane.b32.xlu0 %v63, 15
    %v926 = vpop.permute.xlu0 %925
    %927 = vrot.lane.b32.xlu0 %v64, 15
    %v928 = vpop.permute.xlu0 %927
    %vm929 = vcmp.lt.s32.totalorder %v72, 15
    %v930 = vsel %vm929, %v926, %v928
    %v931 = vsel %vm929, %v928, %v926
    %932 = vrot.lane.b32.xlu0 %v83, 15
    %v933 = vpop.permute.xlu0 %932
    %934 = vrot.lane.b32.xlu0 %v84, 15
    %v935 = vpop.permute.xlu0 %934
    %v936 = vsel %vm929, %v933, %v935
    %v937 = vsel %vm929, %v935, %v933
    %s938 = scalar_lea.vmem [#allocation6], 72
    %v939 = vld [vmem:[%s938] sm:$0xf]
    %v942 = vunpack.c.l.s4 1983009808
    %v943 = vunpack.c.0.s8 %v942
    %v944 = vlaneseq
    %v945 = vshrl.u32 %v944, 7
    %v946 = vsub.s32 %v943, %v945
    %v947 = vrot.slane %v939, %v946
    %v948 = vcombine.high %v947, %v947
    %v951 = vmul.f32 %v931, %v947
    %v952 = vmul.f32 %v930, %v948
    %v953 = vadd.f32 %v923, %v951
    %v954 = vadd.f32 %v924, %v952
    %s955 = scalar_lea.vmem [#allocation6], 268
    %v956 = vld [vmem:[%s955] sm:$0xf]
    %v959 = vunpack.c.l.s4 1983009808
    %v960 = vunpack.c.0.s8 %v959
    %v961 = vlaneseq
    %v962 = vshrl.u32 %v961, 7
    %v963 = vsub.s32 %v960, %v962
    %v964 = vrot.slane %v956, %v963
    %v965 = vcombine.high %v964, %v964
    %v968 = vmul.f32 %v937, %v964
    %v969 = vmul.f32 %v936, %v965
    %v970 = vadd.f32 %v953, %v968
    %v971 = vadd.f32 %v954, %v969
    %972 = vrot.lane.b32.xlu0 %v63, 14
    %v973 = vpop.permute.xlu0 %972
    %974 = vrot.lane.b32.xlu0 %v64, 14
    %v975 = vpop.permute.xlu0 %974
    %vm976 = vcmp.lt.s32.totalorder %v72, 14
    %v977 = vsel %vm976, %v973, %v975
    %v978 = vsel %vm976, %v975, %v973
    %979 = vrot.lane.b32.xlu0 %v83, 14
    %v980 = vpop.permute.xlu0 %979
    %981 = vrot.lane.b32.xlu0 %v84, 14
    %v982 = vpop.permute.xlu0 %981
    %v983 = vsel %vm976, %v980, %v982
    %v984 = vsel %vm976, %v982, %v980
    %s985 = scalar_lea.vmem [#allocation6], 76
    %v986 = vld [vmem:[%s985] sm:$0xf]
    %v989 = vunpack.c.l.s4 1983009808
    %v990 = vunpack.c.0.s8 %v989
    %v991 = vlaneseq
    %v992 = vshrl.u32 %v991, 7
    %v993 = vsub.s32 %v990, %v992
    %v994 = vrot.slane %v986, %v993
    %v995 = vcombine.high %v994, %v994
    %v998 = vmul.f32 %v978, %v994
    %v999 = vmul.f32 %v977, %v995
    %v1000 = vadd.f32 %v970, %v998
    %v1001 = vadd.f32 %v971, %v999
    %s1002 = scalar_lea.vmem [#allocation6], 272
    %v1003 = vld [vmem:[%s1002] sm:$0xf]
    %v1006 = vunpack.c.l.s4 1983009808
    %v1007 = vunpack.c.0.s8 %v1006
    %v1008 = vlaneseq
    %v1009 = vshrl.u32 %v1008, 7
    %v1010 = vsub.s32 %v1007, %v1009
    %v1011 = vrot.slane %v1003, %v1010
    %v1012 = vcombine.high %v1011, %v1011
    %v1015 = vmul.f32 %v984, %v1011
    %v1016 = vmul.f32 %v983, %v1012
    %v1017 = vadd.f32 %v1000, %v1015
    %v1018 = vadd.f32 %v1001, %v1016
    %1019 = vrot.lane.b32.xlu0 %v63, 13
    %v1020 = vpop.permute.xlu0 %1019
    %1021 = vrot.lane.b32.xlu0 %v64, 13
    %v1022 = vpop.permute.xlu0 %1021
    %vm1023 = vcmp.lt.s32.totalorder %v72, 13
    %v1024 = vsel %vm1023, %v1020, %v1022
    %v1025 = vsel %vm1023, %v1022, %v1020
    %1026 = vrot.lane.b32.xlu0 %v83, 13
    %v1027 = vpop.permute.xlu0 %1026
    %1028 = vrot.lane.b32.xlu0 %v84, 13
    %v1029 = vpop.permute.xlu0 %1028
    %v1030 = vsel %vm1023, %v1027, %v1029
    %v1031 = vsel %vm1023, %v1029, %v1027
    %s1032 = scalar_lea.vmem [#allocation6], 80
    %v1033 = vld [vmem:[%s1032] sm:$0xf]
    %v1036 = vunpack.c.l.s4 1983009808
    %v1037 = vunpack.c.0.s8 %v1036
    %v1038 = vlaneseq
    %v1039 = vshrl.u32 %v1038, 7
    %v1040 = vsub.s32 %v1037, %v1039
    %v1041 = vrot.slane %v1033, %v1040
    %v1042 = vcombine.high %v1041, %v1041
    %v1045 = vmul.f32 %v1025, %v1041
    %v1046 = vmul.f32 %v1024, %v1042
    %v1047 = vadd.f32 %v1017, %v1045
    %v1048 = vadd.f32 %v1018, %v1046
    %s1049 = scalar_lea.vmem [#allocation6], 276
    %v1050 = vld [vmem:[%s1049] sm:$0xf]
    %v1053 = vunpack.c.l.s4 1983009808
    %v1054 = vunpack.c.0.s8 %v1053
    %v1055 = vlaneseq
    %v1056 = vshrl.u32 %v1055, 7
    %v1057 = vsub.s32 %v1054, %v1056
    %v1058 = vrot.slane %v1050, %v1057
    %v1059 = vcombine.high %v1058, %v1058
    %v1062 = vmul.f32 %v1031, %v1058
    %v1063 = vmul.f32 %v1030, %v1059
    %v1064 = vadd.f32 %v1047, %v1062
    %v1065 = vadd.f32 %v1048, %v1063
    %1066 = vrot.lane.b32.xlu0 %v63, 3
    %v1067 = vpop.permute.xlu0 %1066
    %1068 = vrot.lane.b32.xlu0 %v64, 3
    %v1069 = vpop.permute.xlu0 %1068
    %vm1070 = vcmp.lt.s32.totalorder %v72, 3
    %v1071 = vsel %vm1070, %v1067, %v1069
    %v1072 = vsel %vm1070, %v1069, %v1067
    %1073 = vrot.lane.b32.xlu0 %v83, 3
    %v1074 = vpop.permute.xlu0 %1073
    %1075 = vrot.lane.b32.xlu0 %v84, 3
    %v1076 = vpop.permute.xlu0 %1075
    %v1077 = vsel %vm1070, %v1074, %v1076
    %v1078 = vsel %vm1070, %v1076, %v1074
    %s1079 = scalar_lea.vmem [#allocation6], 84
    %v1080 = vld [vmem:[%s1079] sm:$0xf]
    %v1083 = vunpack.c.l.s4 1983009808
    %v1084 = vunpack.c.0.s8 %v1083
    %v1085 = vlaneseq
    %v1086 = vshrl.u32 %v1085, 7
    %v1087 = vsub.s32 %v1084, %v1086
    %v1088 = vrot.slane %v1080, %v1087
    %v1089 = vcombine.high %v1088, %v1088
    %v1092 = vmul.f32 %v1072, %v1088
    %v1093 = vmul.f32 %v1071, %v1089
    %v1094 = vadd.f32 %v1064, %v1092
    %v1095 = vadd.f32 %v1065, %v1093
    %s1096 = scalar_lea.vmem [#allocation6], 280
    %v1097 = vld [vmem:[%s1096] sm:$0xf]
    %v1100 = vunpack.c.l.s4 1983009808
    %v1101 = vunpack.c.0.s8 %v1100
    %v1102 = vlaneseq
    %v1103 = vshrl.u32 %v1102, 7
    %v1104 = vsub.s32 %v1101, %v1103
    %v1105 = vrot.slane %v1097, %v1104
    %v1106 = vcombine.high %v1105, %v1105
    %v1109 = vmul.f32 %v1078, %v1105
    %v1110 = vmul.f32 %v1077, %v1106
    %v1111 = vadd.f32 %v1094, %v1109
    %v1112 = vadd.f32 %v1095, %v1110
    %1113 = vrot.lane.b32.xlu0 %v63, 2
    %v1114 = vpop.permute.xlu0 %1113
    %1115 = vrot.lane.b32.xlu0 %v64, 2
    %v1116 = vpop.permute.xlu0 %1115
    %vm1117 = vcmp.lt.s32.totalorder %v72, 2
    %v1118 = vsel %vm1117, %v1114, %v1116
    %v1119 = vsel %vm1117, %v1116, %v1114
    %1120 = vrot.lane.b32.xlu0 %v83, 2
    %v1121 = vpop.permute.xlu0 %1120
    %1122 = vrot.lane.b32.xlu0 %v84, 2
    %v1123 = vpop.permute.xlu0 %1122
    %v1124 = vsel %vm1117, %v1121, %v1123
    %v1125 = vsel %vm1117, %v1123, %v1121
    %s1126 = scalar_lea.vmem [#allocation6], 88
    %v1127 = vld [vmem:[%s1126] sm:$0xf]
    %v1130 = vunpack.c.l.s4 1983009808
    %v1131 = vunpack.c.0.s8 %v1130
    %v1132 = vlaneseq
    %v1133 = vshrl.u32 %v1132, 7
    %v1134 = vsub.s32 %v1131, %v1133
    %v1135 = vrot.slane %v1127, %v1134
    %v1136 = vcombine.high %v1135, %v1135
    %v1139 = vmul.f32 %v1119, %v1135
    %v1140 = vmul.f32 %v1118, %v1136
    %v1141 = vadd.f32 %v1111, %v1139
    %v1142 = vadd.f32 %v1112, %v1140
    %s1143 = scalar_lea.vmem [#allocation6], 284
    %v1144 = vld [vmem:[%s1143] sm:$0xf]
    %v1147 = vunpack.c.l.s4 1983009808
    %v1148 = vunpack.c.0.s8 %v1147
    %v1149 = vlaneseq
    %v1150 = vshrl.u32 %v1149, 7
    %v1151 = vsub.s32 %v1148, %v1150
    %v1152 = vrot.slane %v1144, %v1151
    %v1153 = vcombine.high %v1152, %v1152
    %v1156 = vmul.f32 %v1125, %v1152
    %v1157 = vmul.f32 %v1124, %v1153
    %v1158 = vadd.f32 %v1141, %v1156
    %v1159 = vadd.f32 %v1142, %v1157
    %1160 = vrot.lane.b32.xlu0 %v63, 1
    %v1161 = vpop.permute.xlu0 %1160
    %1162 = vrot.lane.b32.xlu0 %v64, 1
    %v1163 = vpop.permute.xlu0 %1162
    %vm1164 = vcmp.lt.s32.totalorder %v72, 1
    %v1165 = vsel %vm1164, %v1161, %v1163
    %v1166 = vsel %vm1164, %v1163, %v1161
    %1167 = vrot.lane.b32.xlu0 %v83, 1
    %v1168 = vpop.permute.xlu0 %1167
    %1169 = vrot.lane.b32.xlu0 %v84, 1
    %v1170 = vpop.permute.xlu0 %1169
    %v1171 = vsel %vm1164, %v1168, %v1170
    %v1172 = vsel %vm1164, %v1170, %v1168
    %s1173 = scalar_lea.vmem [#allocation6], 92
    %v1174 = vld [vmem:[%s1173] sm:$0xf]
    %v1177 = vunpack.c.l.s4 1983009808
    %v1178 = vunpack.c.0.s8 %v1177
    %v1179 = vlaneseq
    %v1180 = vshrl.u32 %v1179, 7
    %v1181 = vsub.s32 %v1178, %v1180
    %v1182 = vrot.slane %v1174, %v1181
    %v1183 = vcombine.high %v1182, %v1182
    %v1186 = vmul.f32 %v1166, %v1182
    %v1187 = vmul.f32 %v1165, %v1183
    %v1188 = vadd.f32 %v1158, %v1186
    %v1189 = vadd.f32 %v1159, %v1187
    %s1190 = scalar_lea.vmem [#allocation6], 288
    %v1191 = vld [vmem:[%s1190] sm:$0xf]
    %v1194 = vunpack.c.l.s4 1983009808
    %v1195 = vunpack.c.0.s8 %v1194
    %v1196 = vlaneseq
    %v1197 = vshrl.u32 %v1196, 7
    %v1198 = vsub.s32 %v1195, %v1197
    %v1199 = vrot.slane %v1191, %v1198
    %v1200 = vcombine.high %v1199, %v1199
    %v1203 = vmul.f32 %v1172, %v1199
    %v1204 = vmul.f32 %v1171, %v1200
    %v1205 = vadd.f32 %v1188, %v1203
    %v1206 = vadd.f32 %v1189, %v1204
    %s1207 = scalar_lea.vmem [#allocation6], 96
    %v1208 = vld [vmem:[%s1207] sm:$0xf]
    %v1209 = vmul.f32 %v51, %v1208
    %v1212 = vunpack.c.l.s4 1983009808
    %v1213 = vunpack.c.0.s8 %v1212
    %v1214 = vlaneseq
    %v1215 = vshrl.u32 %v1214, 7
    %v1216 = vsub.s32 %v1213, %v1215
    %v1217 = vrot.slane %v1209, %v1216
    %v1218 = vcombine.high %v1217, %v1217
    %v1221 = vadd.f32 %v1205, %v1217
    %v1222 = vadd.f32 %v1206, %v1218
    %s1223 = scalar_lea.vmem [#allocation6], 292
    %v1224 = vld [vmem:[%s1223] sm:$0xf]
    %v1225 = vmul.f32 %v53, %v1224
    %v1228 = vunpack.c.l.s4 1983009808
    %v1229 = vunpack.c.0.s8 %v1228
    %v1230 = vlaneseq
    %v1231 = vshrl.u32 %v1230, 7
    %v1232 = vsub.s32 %v1229, %v1231
    %v1233 = vrot.slane %v1225, %v1232
    %v1234 = vcombine.high %v1233, %v1233
    %v1237 = vadd.f32 %v1221, %v1233
    %v1238 = vadd.f32 %v1222, %v1234
    %1239 = vrot.lane.b32.xlu0 %v63, 127
    %v1240 = vpop.permute.xlu0 %1239
    %1241 = vrot.lane.b32.xlu0 %v64, 127
    %v1242 = vpop.permute.xlu0 %1241
    %vm1243 = vcmp.lt.s32.totalorder %v72, 127
    %v1244 = vsel %vm1243, %v1240, %v1242
    %v1245 = vsel %vm1243, %v1242, %v1240
    %1246 = vrot.lane.b32.xlu0 %v83, 127
    %v1247 = vpop.permute.xlu0 %1246
    %1248 = vrot.lane.b32.xlu0 %v84, 127
    %v1249 = vpop.permute.xlu0 %1248
    %v1250 = vsel %vm1243, %v1247, %v1249
    %v1251 = vsel %vm1243, %v1249, %v1247
    %s1252 = scalar_lea.vmem [#allocation6], 100
    %v1253 = vld [vmem:[%s1252] sm:$0xf]
    %v1256 = vunpack.c.l.s4 1983009808
    %v1257 = vunpack.c.0.s8 %v1256
    %v1258 = vlaneseq
    %v1259 = vshrl.u32 %v1258, 7
    %v1260 = vsub.s32 %v1257, %v1259
    %v1261 = vrot.slane %v1253, %v1260
    %v1262 = vcombine.high %v1261, %v1261
    %v1265 = vmul.f32 %v1244, %v1261
    %v1266 = vmul.f32 %v1245, %v1262
    %v1267 = vadd.f32 %v1237, %v1265
    %v1268 = vadd.f32 %v1238, %v1266
    %s1269 = scalar_lea.vmem [#allocation6], 296
    %v1270 = vld [vmem:[%s1269] sm:$0xf]
    %v1273 = vunpack.c.l.s4 1983009808
    %v1274 = vunpack.c.0.s8 %v1273
    %v1275 = vlaneseq
    %v1276 = vshrl.u32 %v1275, 7
    %v1277 = vsub.s32 %v1274, %v1276
    %v1278 = vrot.slane %v1270, %v1277
    %v1279 = vcombine.high %v1278, %v1278
    %v1282 = vmul.f32 %v1250, %v1278
    %v1283 = vmul.f32 %v1251, %v1279
    %v1284 = vadd.f32 %v1267, %v1282
    %v1285 = vadd.f32 %v1268, %v1283
    %1286 = vrot.lane.b32.xlu0 %v63, 126
    %v1287 = vpop.permute.xlu0 %1286
    %1288 = vrot.lane.b32.xlu0 %v64, 126
    %v1289 = vpop.permute.xlu0 %1288
    %vm1290 = vcmp.lt.s32.totalorder %v72, 126
    %v1291 = vsel %vm1290, %v1287, %v1289
    %v1292 = vsel %vm1290, %v1289, %v1287
    %1293 = vrot.lane.b32.xlu0 %v83, 126
    %v1294 = vpop.permute.xlu0 %1293
    %1295 = vrot.lane.b32.xlu0 %v84, 126
    %v1296 = vpop.permute.xlu0 %1295
    %v1297 = vsel %vm1290, %v1294, %v1296
    %v1298 = vsel %vm1290, %v1296, %v1294
    %s1299 = scalar_lea.vmem [#allocation6], 104
    %v1300 = vld [vmem:[%s1299] sm:$0xf]
    %v1303 = vunpack.c.l.s4 1983009808
    %v1304 = vunpack.c.0.s8 %v1303
    %v1305 = vlaneseq
    %v1306 = vshrl.u32 %v1305, 7
    %v1307 = vsub.s32 %v1304, %v1306
    %v1308 = vrot.slane %v1300, %v1307
    %v1309 = vcombine.high %v1308, %v1308
    %v1312 = vmul.f32 %v1291, %v1308
    %v1313 = vmul.f32 %v1292, %v1309
    %v1314 = vadd.f32 %v1284, %v1312
    %v1315 = vadd.f32 %v1285, %v1313
    %s1316 = scalar_lea.vmem [#allocation6], 300
    %v1317 = vld [vmem:[%s1316] sm:$0xf]
    %v1320 = vunpack.c.l.s4 1983009808
    %v1321 = vunpack.c.0.s8 %v1320
    %v1322 = vlaneseq
    %v1323 = vshrl.u32 %v1322, 7
    %v1324 = vsub.s32 %v1321, %v1323
    %v1325 = vrot.slane %v1317, %v1324
    %v1326 = vcombine.high %v1325, %v1325
    %v1329 = vmul.f32 %v1297, %v1325
    %v1330 = vmul.f32 %v1298, %v1326
    %v1331 = vadd.f32 %v1314, %v1329
    %v1332 = vadd.f32 %v1315, %v1330
    %1333 = vrot.lane.b32.xlu0 %v63, 125
    %v1334 = vpop.permute.xlu0 %1333
    %1335 = vrot.lane.b32.xlu0 %v64, 125
    %v1336 = vpop.permute.xlu0 %1335
    %vm1337 = vcmp.lt.s32.totalorder %v72, 125
    %v1338 = vsel %vm1337, %v1334, %v1336
    %v1339 = vsel %vm1337, %v1336, %v1334
    %1340 = vrot.lane.b32.xlu0 %v83, 125
    %v1341 = vpop.permute.xlu0 %1340
    %1342 = vrot.lane.b32.xlu0 %v84, 125
    %v1343 = vpop.permute.xlu0 %1342
    %v1344 = vsel %vm1337, %v1341, %v1343
    %v1345 = vsel %vm1337, %v1343, %v1341
    %s1346 = scalar_lea.vmem [#allocation6], 108
    %v1347 = vld [vmem:[%s1346] sm:$0xf]
    %v1350 = vunpack.c.l.s4 1983009808
    %v1351 = vunpack.c.0.s8 %v1350
    %v1352 = vlaneseq
    %v1353 = vshrl.u32 %v1352, 7
    %v1354 = vsub.s32 %v1351, %v1353
    %v1355 = vrot.slane %v1347, %v1354
    %v1356 = vcombine.high %v1355, %v1355
    %v1359 = vmul.f32 %v1338, %v1355
    %v1360 = vmul.f32 %v1339, %v1356
    %v1361 = vadd.f32 %v1331, %v1359
    %v1362 = vadd.f32 %v1332, %v1360
    %s1363 = scalar_lea.vmem [#allocation6], 304
    %v1364 = vld [vmem:[%s1363] sm:$0xf]
    %v1367 = vunpack.c.l.s4 1983009808
    %v1368 = vunpack.c.0.s8 %v1367
    %v1369 = vlaneseq
    %v1370 = vshrl.u32 %v1369, 7
    %v1371 = vsub.s32 %v1368, %v1370
    %v1372 = vrot.slane %v1364, %v1371
    %v1373 = vcombine.high %v1372, %v1372
    %v1376 = vmul.f32 %v1344, %v1372
    %v1377 = vmul.f32 %v1345, %v1373
    %v1378 = vadd.f32 %v1361, %v1376
    %v1379 = vadd.f32 %v1362, %v1377
    %1380 = vrot.lane.b32.xlu0 %v63, 115
    %v1381 = vpop.permute.xlu0 %1380
    %1382 = vrot.lane.b32.xlu0 %v64, 115
    %v1383 = vpop.permute.xlu0 %1382
    %vm1384 = vcmp.lt.s32.totalorder %v72, 115
    %v1385 = vsel %vm1384, %v1381, %v1383
    %v1386 = vsel %vm1384, %v1383, %v1381
    %1387 = vrot.lane.b32.xlu0 %v83, 115
    %v1388 = vpop.permute.xlu0 %1387
    %1389 = vrot.lane.b32.xlu0 %v84, 115
    %v1390 = vpop.permute.xlu0 %1389
    %v1391 = vsel %vm1384, %v1388, %v1390
    %v1392 = vsel %vm1384, %v1390, %v1388
    %s1393 = scalar_lea.vmem [#allocation6], 112
    %v1394 = vld [vmem:[%s1393] sm:$0xf]
    %v1397 = vunpack.c.l.s4 1983009808
    %v1398 = vunpack.c.0.s8 %v1397
    %v1399 = vlaneseq
    %v1400 = vshrl.u32 %v1399, 7
    %v1401 = vsub.s32 %v1398, %v1400
    %v1402 = vrot.slane %v1394, %v1401
    %v1403 = vcombine.high %v1402, %v1402
    %v1406 = vmul.f32 %v1385, %v1402
    %v1407 = vmul.f32 %v1386, %v1403
    %v1408 = vadd.f32 %v1378, %v1406
    %v1409 = vadd.f32 %v1379, %v1407
    %s1410 = scalar_lea.vmem [#allocation6], 308
    %v1411 = vld [vmem:[%s1410] sm:$0xf]
    %v1414 = vunpack.c.l.s4 1983009808
    %v1415 = vunpack.c.0.s8 %v1414
    %v1416 = vlaneseq
    %v1417 = vshrl.u32 %v1416, 7
    %v1418 = vsub.s32 %v1415, %v1417
    %v1419 = vrot.slane %v1411, %v1418
    %v1420 = vcombine.high %v1419, %v1419
    %v1423 = vmul.f32 %v1391, %v1419
    %v1424 = vmul.f32 %v1392, %v1420
    %v1425 = vadd.f32 %v1408, %v1423
    %v1426 = vadd.f32 %v1409, %v1424
    %1427 = vrot.lane.b32.xlu0 %v63, 114
    %v1428 = vpop.permute.xlu0 %1427
    %1429 = vrot.lane.b32.xlu0 %v64, 114
    %v1430 = vpop.permute.xlu0 %1429
    %vm1431 = vcmp.lt.s32.totalorder %v72, 114
    %v1432 = vsel %vm1431, %v1428, %v1430
    %v1433 = vsel %vm1431, %v1430, %v1428
    %1434 = vrot.lane.b32.xlu0 %v83, 114
    %v1435 = vpop.permute.xlu0 %1434
    %1436 = vrot.lane.b32.xlu0 %v84, 114
    %v1437 = vpop.permute.xlu0 %1436
    %v1438 = vsel %vm1431, %v1435, %v1437
    %v1439 = vsel %vm1431, %v1437, %v1435
    %s1440 = scalar_lea.vmem [#allocation6], 116
    %v1441 = vld [vmem:[%s1440] sm:$0xf]
    %v1444 = vunpack.c.l.s4 1983009808
    %v1445 = vunpack.c.0.s8 %v1444
    %v1446 = vlaneseq
    %v1447 = vshrl.u32 %v1446, 7
    %v1448 = vsub.s32 %v1445, %v1447
    %v1449 = vrot.slane %v1441, %v1448
    %v1450 = vcombine.high %v1449, %v1449
    %v1453 = vmul.f32 %v1432, %v1449
    %v1454 = vmul.f32 %v1433, %v1450
    %v1455 = vadd.f32 %v1425, %v1453
    %v1456 = vadd.f32 %v1426, %v1454
    %s1457 = scalar_lea.vmem [#allocation6], 312
    %v1458 = vld [vmem:[%s1457] sm:$0xf]
    %v1461 = vunpack.c.l.s4 1983009808
    %v1462 = vunpack.c.0.s8 %v1461
    %v1463 = vlaneseq
    %v1464 = vshrl.u32 %v1463, 7
    %v1465 = vsub.s32 %v1462, %v1464
    %v1466 = vrot.slane %v1458, %v1465
    %v1467 = vcombine.high %v1466, %v1466
    %v1470 = vmul.f32 %v1438, %v1466
    %v1471 = vmul.f32 %v1439, %v1467
    %v1472 = vadd.f32 %v1455, %v1470
    %v1473 = vadd.f32 %v1456, %v1471
    %1474 = vrot.lane.b32.xlu0 %v63, 113
    %v1475 = vpop.permute.xlu0 %1474
    %1476 = vrot.lane.b32.xlu0 %v64, 113
    %v1477 = vpop.permute.xlu0 %1476
    %vm1478 = vcmp.lt.s32.totalorder %v72, 113
    %v1479 = vsel %vm1478, %v1475, %v1477
    %v1480 = vsel %vm1478, %v1477, %v1475
    %1481 = vrot.lane.b32.xlu0 %v83, 113
    %v1482 = vpop.permute.xlu0 %1481
    %1483 = vrot.lane.b32.xlu0 %v84, 113
    %v1484 = vpop.permute.xlu0 %1483
    %v1485 = vsel %vm1478, %v1482, %v1484
    %v1486 = vsel %vm1478, %v1484, %v1482
    %s1487 = scalar_lea.vmem [#allocation6], 120
    %v1488 = vld [vmem:[%s1487] sm:$0xf]
    %v1491 = vunpack.c.l.s4 1983009808
    %v1492 = vunpack.c.0.s8 %v1491
    %v1493 = vlaneseq
    %v1494 = vshrl.u32 %v1493, 7
    %v1495 = vsub.s32 %v1492, %v1494
    %v1496 = vrot.slane %v1488, %v1495
    %v1497 = vcombine.high %v1496, %v1496
    %v1500 = vmul.f32 %v1479, %v1496
    %v1501 = vmul.f32 %v1480, %v1497
    %v1502 = vadd.f32 %v1472, %v1500
    %v1503 = vadd.f32 %v1473, %v1501
    %s1504 = scalar_lea.vmem [#allocation6], 316
    %v1505 = vld [vmem:[%s1504] sm:$0xf]
    %v1508 = vunpack.c.l.s4 1983009808
    %v1509 = vunpack.c.0.s8 %v1508
    %v1510 = vlaneseq
    %v1511 = vshrl.u32 %v1510, 7
    %v1512 = vsub.s32 %v1509, %v1511
    %v1513 = vrot.slane %v1505, %v1512
    %v1514 = vcombine.high %v1513, %v1513
    %v1517 = vmul.f32 %v1485, %v1513
    %v1518 = vmul.f32 %v1486, %v1514
    %v1519 = vadd.f32 %v1502, %v1517
    %v1520 = vadd.f32 %v1503, %v1518
    %1521 = vrot.lane.b32.xlu0 %v63, 112
    %v1522 = vpop.permute.xlu0 %1521
    %1523 = vrot.lane.b32.xlu0 %v64, 112
    %v1524 = vpop.permute.xlu0 %1523
    %vm1525 = vcmp.lt.s32.totalorder %v72, 112
    %v1526 = vsel %vm1525, %v1522, %v1524
    %v1527 = vsel %vm1525, %v1524, %v1522
    %1528 = vrot.lane.b32.xlu0 %v83, 112
    %v1529 = vpop.permute.xlu0 %1528
    %1530 = vrot.lane.b32.xlu0 %v84, 112
    %v1531 = vpop.permute.xlu0 %1530
    %v1532 = vsel %vm1525, %v1529, %v1531
    %v1533 = vsel %vm1525, %v1531, %v1529
    %s1534 = scalar_lea.vmem [#allocation6], 124
    %v1535 = vld [vmem:[%s1534] sm:$0xf]
    %v1538 = vunpack.c.l.s4 1983009808
    %v1539 = vunpack.c.0.s8 %v1538
    %v1540 = vlaneseq
    %v1541 = vshrl.u32 %v1540, 7
    %v1542 = vsub.s32 %v1539, %v1541
    %v1543 = vrot.slane %v1535, %v1542
    %v1544 = vcombine.high %v1543, %v1543
    %v1547 = vmul.f32 %v1526, %v1543
    %v1548 = vmul.f32 %v1527, %v1544
    %v1549 = vadd.f32 %v1519, %v1547
    %v1550 = vadd.f32 %v1520, %v1548
    %s1551 = scalar_lea.vmem [#allocation6], 320
    %v1552 = vld [vmem:[%s1551] sm:$0xf]
    %v1555 = vunpack.c.l.s4 1983009808
    %v1556 = vunpack.c.0.s8 %v1555
    %v1557 = vlaneseq
    %v1558 = vshrl.u32 %v1557, 7
    %v1559 = vsub.s32 %v1556, %v1558
    %v1560 = vrot.slane %v1552, %v1559
    %v1561 = vcombine.high %v1560, %v1560
    %v1564 = vmul.f32 %v1532, %v1560
    %v1565 = vmul.f32 %v1533, %v1561
    %v1566 = vadd.f32 %v1549, %v1564
    %v1567 = vadd.f32 %v1550, %v1565
    %1568 = vrot.lane.b32.xlu0 %v63, 111
    %v1569 = vpop.permute.xlu0 %1568
    %1570 = vrot.lane.b32.xlu0 %v64, 111
    %v1571 = vpop.permute.xlu0 %1570
    %vm1572 = vcmp.lt.s32.totalorder %v72, 111
    %v1573 = vsel %vm1572, %v1569, %v1571
    %v1574 = vsel %vm1572, %v1571, %v1569
    %1575 = vrot.lane.b32.xlu0 %v83, 111
    %v1576 = vpop.permute.xlu0 %1575
    %1577 = vrot.lane.b32.xlu0 %v84, 111
    %v1578 = vpop.permute.xlu0 %1577
    %v1579 = vsel %vm1572, %v1576, %v1578
    %v1580 = vsel %vm1572, %v1578, %v1576
    %s1581 = scalar_lea.vmem [#allocation6], 128
    %v1582 = vld [vmem:[%s1581] sm:$0xf]
    %v1585 = vunpack.c.l.s4 1983009808
    %v1586 = vunpack.c.0.s8 %v1585
    %v1587 = vlaneseq
    %v1588 = vshrl.u32 %v1587, 7
    %v1589 = vsub.s32 %v1586, %v1588
    %v1590 = vrot.slane %v1582, %v1589
    %v1591 = vcombine.high %v1590, %v1590
    %v1594 = vmul.f32 %v1573, %v1590
    %v1595 = vmul.f32 %v1574, %v1591
    %v1596 = vadd.f32 %v1566, %v1594
    %v1597 = vadd.f32 %v1567, %v1595
    %s1598 = scalar_lea.vmem [#allocation6], 324
    %v1599 = vld [vmem:[%s1598] sm:$0xf]
    %v1602 = vunpack.c.l.s4 1983009808
    %v1603 = vunpack.c.0.s8 %v1602
    %v1604 = vlaneseq
    %v1605 = vshrl.u32 %v1604, 7
    %v1606 = vsub.s32 %v1603, %v1605
    %v1607 = vrot.slane %v1599, %v1606
    %v1608 = vcombine.high %v1607, %v1607
    %v1611 = vmul.f32 %v1579, %v1607
    %v1612 = vmul.f32 %v1580, %v1608
    %v1613 = vadd.f32 %v1596, %v1611
    %v1614 = vadd.f32 %v1597, %v1612
    %1615 = vrot.lane.b32.xlu0 %v63, 110
    %v1616 = vpop.permute.xlu0 %1615
    %1617 = vrot.lane.b32.xlu0 %v64, 110
    %v1618 = vpop.permute.xlu0 %1617
    %vm1619 = vcmp.lt.s32.totalorder %v72, 110
    %v1620 = vsel %vm1619, %v1616, %v1618
    %v1621 = vsel %vm1619, %v1618, %v1616
    %1622 = vrot.lane.b32.xlu0 %v83, 110
    %v1623 = vpop.permute.xlu0 %1622
    %1624 = vrot.lane.b32.xlu0 %v84, 110
    %v1625 = vpop.permute.xlu0 %1624
    %v1626 = vsel %vm1619, %v1623, %v1625
    %v1627 = vsel %vm1619, %v1625, %v1623
    %s1628 = scalar_lea.vmem [#allocation6], 132
    %v1629 = vld [vmem:[%s1628] sm:$0xf]
    %v1632 = vunpack.c.l.s4 1983009808
    %v1633 = vunpack.c.0.s8 %v1632
    %v1634 = vlaneseq
    %v1635 = vshrl.u32 %v1634, 7
    %v1636 = vsub.s32 %v1633, %v1635
    %v1637 = vrot.slane %v1629, %v1636
    %v1638 = vcombine.high %v1637, %v1637
    %v1641 = vmul.f32 %v1620, %v1637
    %v1642 = vmul.f32 %v1621, %v1638
    %v1643 = vadd.f32 %v1613, %v1641
    %v1644 = vadd.f32 %v1614, %v1642
    %s1645 = scalar_lea.vmem [#allocation6], 328
    %v1646 = vld [vmem:[%s1645] sm:$0xf]
    %v1649 = vunpack.c.l.s4 1983009808
    %v1650 = vunpack.c.0.s8 %v1649
    %v1651 = vlaneseq
    %v1652 = vshrl.u32 %v1651, 7
    %v1653 = vsub.s32 %v1650, %v1652
    %v1654 = vrot.slane %v1646, %v1653
    %v1655 = vcombine.high %v1654, %v1654
    %v1658 = vmul.f32 %v1626, %v1654
    %v1659 = vmul.f32 %v1627, %v1655
    %v1660 = vadd.f32 %v1643, %v1658
    %v1661 = vadd.f32 %v1644, %v1659
    %1662 = vrot.lane.b32.xlu0 %v63, 109
    %v1663 = vpop.permute.xlu0 %1662
    %1664 = vrot.lane.b32.xlu0 %v64, 109
    %v1665 = vpop.permute.xlu0 %1664
    %vm1666 = vcmp.lt.s32.totalorder %v72, 109
    %v1667 = vsel %vm1666, %v1663, %v1665
    %v1668 = vsel %vm1666, %v1665, %v1663
    %1669 = vrot.lane.b32.xlu0 %v83, 109
    %v1670 = vpop.permute.xlu0 %1669
    %1671 = vrot.lane.b32.xlu0 %v84, 109
    %v1672 = vpop.permute.xlu0 %1671
    %v1673 = vsel %vm1666, %v1670, %v1672
    %v1674 = vsel %vm1666, %v1672, %v1670
    %s1675 = scalar_lea.vmem [#allocation6], 136
    %v1676 = vld [vmem:[%s1675] sm:$0xf]
    %v1679 = vunpack.c.l.s4 1983009808
    %v1680 = vunpack.c.0.s8 %v1679
    %v1681 = vlaneseq
    %v1682 = vshrl.u32 %v1681, 7
    %v1683 = vsub.s32 %v1680, %v1682
    %v1684 = vrot.slane %v1676, %v1683
    %v1685 = vcombine.high %v1684, %v1684
    %v1688 = vmul.f32 %v1667, %v1684
    %v1689 = vmul.f32 %v1668, %v1685
    %v1690 = vadd.f32 %v1660, %v1688
    %v1691 = vadd.f32 %v1661, %v1689
    %s1692 = scalar_lea.vmem [#allocation6], 332
    %v1693 = vld [vmem:[%s1692] sm:$0xf]
    %v1696 = vunpack.c.l.s4 1983009808
    %v1697 = vunpack.c.0.s8 %v1696
    %v1698 = vlaneseq
    %v1699 = vshrl.u32 %v1698, 7
    %v1700 = vsub.s32 %v1697, %v1699
    %v1701 = vrot.slane %v1693, %v1700
    %v1702 = vcombine.high %v1701, %v1701
    %v1705 = vmul.f32 %v1673, %v1701
    %v1706 = vmul.f32 %v1674, %v1702
    %v1707 = vadd.f32 %v1690, %v1705
    %v1708 = vadd.f32 %v1691, %v1706
    %1709 = vrot.lane.b32.xlu0 %v63, 99
    %v1710 = vpop.permute.xlu0 %1709
    %1711 = vrot.lane.b32.xlu0 %v64, 99
    %v1712 = vpop.permute.xlu0 %1711
    %vm1713 = vcmp.lt.s32.totalorder %v72, 99
    %v1714 = vsel %vm1713, %v1710, %v1712
    %v1715 = vsel %vm1713, %v1712, %v1710
    %1716 = vrot.lane.b32.xlu0 %v83, 99
    %v1717 = vpop.permute.xlu0 %1716
    %1718 = vrot.lane.b32.xlu0 %v84, 99
    %v1719 = vpop.permute.xlu0 %1718
    %v1720 = vsel %vm1713, %v1717, %v1719
    %v1721 = vsel %vm1713, %v1719, %v1717
    %s1722 = scalar_lea.vmem [#allocation6], 140
    %v1723 = vld [vmem:[%s1722] sm:$0xf]
    %v1726 = vunpack.c.l.s4 1983009808
    %v1727 = vunpack.c.0.s8 %v1726
    %v1728 = vlaneseq
    %v1729 = vshrl.u32 %v1728, 7
    %v1730 = vsub.s32 %v1727, %v1729
    %v1731 = vrot.slane %v1723, %v1730
    %v1732 = vcombine.high %v1731, %v1731
    %v1735 = vmul.f32 %v1714, %v1731
    %v1736 = vmul.f32 %v1715, %v1732
    %v1737 = vadd.f32 %v1707, %v1735
    %v1738 = vadd.f32 %v1708, %v1736
    %s1739 = scalar_lea.vmem [#allocation6], 336
    %v1740 = vld [vmem:[%s1739] sm:$0xf]
    %v1743 = vunpack.c.l.s4 1983009808
    %v1744 = vunpack.c.0.s8 %v1743
    %v1745 = vlaneseq
    %v1746 = vshrl.u32 %v1745, 7
    %v1747 = vsub.s32 %v1744, %v1746
    %v1748 = vrot.slane %v1740, %v1747
    %v1749 = vcombine.high %v1748, %v1748
    %v1752 = vmul.f32 %v1720, %v1748
    %v1753 = vmul.f32 %v1721, %v1749
    %v1754 = vadd.f32 %v1737, %v1752
    %v1755 = vadd.f32 %v1738, %v1753
    %1756 = vrot.lane.b32.xlu0 %v63, 98
    %v1757 = vpop.permute.xlu0 %1756
    %1758 = vrot.lane.b32.xlu0 %v64, 98
    %v1759 = vpop.permute.xlu0 %1758
    %vm1760 = vcmp.lt.s32.totalorder %v72, 98
    %v1761 = vsel %vm1760, %v1757, %v1759
    %v1762 = vsel %vm1760, %v1759, %v1757
    %1763 = vrot.lane.b32.xlu0 %v83, 98
    %v1764 = vpop.permute.xlu0 %1763
    %1765 = vrot.lane.b32.xlu0 %v84, 98
    %v1766 = vpop.permute.xlu0 %1765
    %v1767 = vsel %vm1760, %v1764, %v1766
    %v1768 = vsel %vm1760, %v1766, %v1764
    %s1769 = scalar_lea.vmem [#allocation6], 144
    %v1770 = vld [vmem:[%s1769] sm:$0xf]
    %v1773 = vunpack.c.l.s4 1983009808
    %v1774 = vunpack.c.0.s8 %v1773
    %v1775 = vlaneseq
    %v1776 = vshrl.u32 %v1775, 7
    %v1777 = vsub.s32 %v1774, %v1776
    %v1778 = vrot.slane %v1770, %v1777
    %v1779 = vcombine.high %v1778, %v1778
    %v1782 = vmul.f32 %v1761, %v1778
    %v1783 = vmul.f32 %v1762, %v1779
    %v1784 = vadd.f32 %v1754, %v1782
    %v1785 = vadd.f32 %v1755, %v1783
    %s1786 = scalar_lea.vmem [#allocation6], 340
    %v1787 = vld [vmem:[%s1786] sm:$0xf]
    %v1790 = vunpack.c.l.s4 1983009808
    %v1791 = vunpack.c.0.s8 %v1790
    %v1792 = vlaneseq
    %v1793 = vshrl.u32 %v1792, 7
    %v1794 = vsub.s32 %v1791, %v1793
    %v1795 = vrot.slane %v1787, %v1794
    %v1796 = vcombine.high %v1795, %v1795
    %v1799 = vmul.f32 %v1767, %v1795
    %v1800 = vmul.f32 %v1768, %v1796
    %v1801 = vadd.f32 %v1784, %v1799
    %v1802 = vadd.f32 %v1785, %v1800
    %1803 = vrot.lane.b32.xlu0 %v63, 97
    %v1804 = vpop.permute.xlu0 %1803
    %1805 = vrot.lane.b32.xlu0 %v64, 97
    %v1806 = vpop.permute.xlu0 %1805
    %vm1807 = vcmp.lt.s32.totalorder %v72, 97
    %v1808 = vsel %vm1807, %v1804, %v1806
    %v1809 = vsel %vm1807, %v1806, %v1804
    %1810 = vrot.lane.b32.xlu0 %v83, 97
    %v1811 = vpop.permute.xlu0 %1810
    %1812 = vrot.lane.b32.xlu0 %v84, 97
    %v1813 = vpop.permute.xlu0 %1812
    %v1814 = vsel %vm1807, %v1811, %v1813
    %v1815 = vsel %vm1807, %v1813, %v1811
    %s1816 = scalar_lea.vmem [#allocation6], 148
    %v1817 = vld [vmem:[%s1816] sm:$0xf]
    %v1820 = vunpack.c.l.s4 1983009808
    %v1821 = vunpack.c.0.s8 %v1820
    %v1822 = vlaneseq
    %v1823 = vshrl.u32 %v1822, 7
    %v1824 = vsub.s32 %v1821, %v1823
    %v1825 = vrot.slane %v1817, %v1824
    %v1826 = vcombine.high %v1825, %v1825
    %v1829 = vmul.f32 %v1808, %v1825
    %v1830 = vmul.f32 %v1809, %v1826
    %v1831 = vadd.f32 %v1801, %v1829
    %v1832 = vadd.f32 %v1802, %v1830
    %s1833 = scalar_lea.vmem [#allocation6], 344
    %v1834 = vld [vmem:[%s1833] sm:$0xf]
    %v1837 = vunpack.c.l.s4 1983009808
    %v1838 = vunpack.c.0.s8 %v1837
    %v1839 = vlaneseq
    %v1840 = vshrl.u32 %v1839, 7
    %v1841 = vsub.s32 %v1838, %v1840
    %v1842 = vrot.slane %v1834, %v1841
    %v1843 = vcombine.high %v1842, %v1842
    %v1846 = vmul.f32 %v1814, %v1842
    %v1847 = vmul.f32 %v1815, %v1843
    %v1848 = vadd.f32 %v1831, %v1846
    %v1849 = vadd.f32 %v1832, %v1847
    %1850 = vrot.lane.b32.xlu0 %v63, 96
    %v1851 = vpop.permute.xlu0 %1850
    %1852 = vrot.lane.b32.xlu0 %v64, 96
    %v1853 = vpop.permute.xlu0 %1852
    %vm1854 = vcmp.lt.s32.totalorder %v72, 96
    %v1855 = vsel %vm1854, %v1851, %v1853
    %v1856 = vsel %vm1854, %v1853, %v1851
    %1857 = vrot.lane.b32.xlu0 %v83, 96
    %v1858 = vpop.permute.xlu0 %1857
    %1859 = vrot.lane.b32.xlu0 %v84, 96
    %v1860 = vpop.permute.xlu0 %1859
    %v1861 = vsel %vm1854, %v1858, %v1860
    %v1862 = vsel %vm1854, %v1860, %v1858
    %s1863 = scalar_lea.vmem [#allocation6], 152
    %v1864 = vld [vmem:[%s1863] sm:$0xf]
    %v1867 = vunpack.c.l.s4 1983009808
    %v1868 = vunpack.c.0.s8 %v1867
    %v1869 = vlaneseq
    %v1870 = vshrl.u32 %v1869, 7
    %v1871 = vsub.s32 %v1868, %v1870
    %v1872 = vrot.slane %v1864, %v1871
    %v1873 = vcombine.high %v1872, %v1872
    %v1876 = vmul.f32 %v1855, %v1872
    %v1877 = vmul.f32 %v1856, %v1873
    %v1878 = vadd.f32 %v1848, %v1876
    %v1879 = vadd.f32 %v1849, %v1877
    %s1880 = scalar_lea.vmem [#allocation6], 348
    %v1881 = vld [vmem:[%s1880] sm:$0xf]
    %v1884 = vunpack.c.l.s4 1983009808
    %v1885 = vunpack.c.0.s8 %v1884
    %v1886 = vlaneseq
    %v1887 = vshrl.u32 %v1886, 7
    %v1888 = vsub.s32 %v1885, %v1887
    %v1889 = vrot.slane %v1881, %v1888
    %v1890 = vcombine.high %v1889, %v1889
    %v1893 = vmul.f32 %v1861, %v1889
    %v1894 = vmul.f32 %v1862, %v1890
    %v1895 = vadd.f32 %v1878, %v1893
    %v1896 = vadd.f32 %v1879, %v1894
    %1897 = vrot.lane.b32.xlu0 %v63, 95
    %v1898 = vpop.permute.xlu0 %1897
    %1899 = vrot.lane.b32.xlu0 %v64, 95
    %v1900 = vpop.permute.xlu0 %1899
    %vm1901 = vcmp.lt.s32.totalorder %v72, 95
    %v1902 = vsel %vm1901, %v1898, %v1900
    %v1903 = vsel %vm1901, %v1900, %v1898
    %1904 = vrot.lane.b32.xlu0 %v83, 95
    %v1905 = vpop.permute.xlu0 %1904
    %1906 = vrot.lane.b32.xlu0 %v84, 95
    %v1907 = vpop.permute.xlu0 %1906
    %v1908 = vsel %vm1901, %v1905, %v1907
    %v1909 = vsel %vm1901, %v1907, %v1905
    %s1910 = scalar_lea.vmem [#allocation6], 156
    %v1911 = vld [vmem:[%s1910] sm:$0xf]
    %v1914 = vunpack.c.l.s4 1983009808
    %v1915 = vunpack.c.0.s8 %v1914
    %v1916 = vlaneseq
    %v1917 = vshrl.u32 %v1916, 7
    %v1918 = vsub.s32 %v1915, %v1917
    %v1919 = vrot.slane %v1911, %v1918
    %v1920 = vcombine.high %v1919, %v1919
    %v1923 = vmul.f32 %v1902, %v1919
    %v1924 = vmul.f32 %v1903, %v1920
    %v1925 = vadd.f32 %v1895, %v1923
    %v1926 = vadd.f32 %v1896, %v1924
    %s1927 = scalar_lea.vmem [#allocation6], 352
    %v1928 = vld [vmem:[%s1927] sm:$0xf]
    %v1931 = vunpack.c.l.s4 1983009808
    %v1932 = vunpack.c.0.s8 %v1931
    %v1933 = vlaneseq
    %v1934 = vshrl.u32 %v1933, 7
    %v1935 = vsub.s32 %v1932, %v1934
    %v1936 = vrot.slane %v1928, %v1935
    %v1937 = vcombine.high %v1936, %v1936
    %v1940 = vmul.f32 %v1908, %v1936
    %v1941 = vmul.f32 %v1909, %v1937
    %v1942 = vadd.f32 %v1925, %v1940
    %v1943 = vadd.f32 %v1926, %v1941
    %1944 = vrot.lane.b32.xlu0 %v63, 94
    %v1945 = vpop.permute.xlu0 %1944
    %1946 = vrot.lane.b32.xlu0 %v64, 94
    %v1947 = vpop.permute.xlu0 %1946
    %vm1948 = vcmp.lt.s32.totalorder %v72, 94
    %v1949 = vsel %vm1948, %v1945, %v1947
    %v1950 = vsel %vm1948, %v1947, %v1945
    %1951 = vrot.lane.b32.xlu0 %v83, 94
    %v1952 = vpop.permute.xlu0 %1951
    %1953 = vrot.lane.b32.xlu0 %v84, 94
    %v1954 = vpop.permute.xlu0 %1953
    %v1955 = vsel %vm1948, %v1952, %v1954
    %v1956 = vsel %vm1948, %v1954, %v1952
    %s1957 = scalar_lea.vmem [#allocation6], 160
    %v1958 = vld [vmem:[%s1957] sm:$0xf]
    %v1961 = vunpack.c.l.s4 1983009808
    %v1962 = vunpack.c.0.s8 %v1961
    %v1963 = vlaneseq
    %v1964 = vshrl.u32 %v1963, 7
    %v1965 = vsub.s32 %v1962, %v1964
    %v1966 = vrot.slane %v1958, %v1965
    %v1967 = vcombine.high %v1966, %v1966
    %v1970 = vmul.f32 %v1949, %v1966
    %v1971 = vmul.f32 %v1950, %v1967
    %v1972 = vadd.f32 %v1942, %v1970
    %v1973 = vadd.f32 %v1943, %v1971
    %s1974 = scalar_lea.vmem [#allocation6], 356
    %v1975 = vld [vmem:[%s1974] sm:$0xf]
    %v1978 = vunpack.c.l.s4 1983009808
    %v1979 = vunpack.c.0.s8 %v1978
    %v1980 = vlaneseq
    %v1981 = vshrl.u32 %v1980, 7
    %v1982 = vsub.s32 %v1979, %v1981
    %v1983 = vrot.slane %v1975, %v1982
    %v1984 = vcombine.high %v1983, %v1983
    %v1987 = vmul.f32 %v1955, %v1983
    %v1988 = vmul.f32 %v1956, %v1984
    %v1989 = vadd.f32 %v1972, %v1987
    %v1990 = vadd.f32 %v1973, %v1988
    %1991 = vrot.lane.b32.xlu0 %v63, 93
    %v1992 = vpop.permute.xlu0 %1991
    %1993 = vrot.lane.b32.xlu0 %v64, 93
    %v1994 = vpop.permute.xlu0 %1993
    %vm1995 = vcmp.lt.s32.totalorder %v72, 93
    %v1996 = vsel %vm1995, %v1992, %v1994
    %v1997 = vsel %vm1995, %v1994, %v1992
    %1998 = vrot.lane.b32.xlu0 %v83, 93
    %v1999 = vpop.permute.xlu0 %1998
    %2000 = vrot.lane.b32.xlu0 %v84, 93
    %v2001 = vpop.permute.xlu0 %2000
    %v2002 = vsel %vm1995, %v1999, %v2001
    %v2003 = vsel %vm1995, %v2001, %v1999
    %s2004 = scalar_lea.vmem [#allocation6], 164
    %v2005 = vld [vmem:[%s2004] sm:$0xf]
    %v2008 = vunpack.c.l.s4 1983009808
    %v2009 = vunpack.c.0.s8 %v2008
    %v2010 = vlaneseq
    %v2011 = vshrl.u32 %v2010, 7
    %v2012 = vsub.s32 %v2009, %v2011
    %v2013 = vrot.slane %v2005, %v2012
    %v2014 = vcombine.high %v2013, %v2013
    %v2017 = vmul.f32 %v1996, %v2013
    %v2018 = vmul.f32 %v1997, %v2014
    %v2019 = vadd.f32 %v1989, %v2017
    %v2020 = vadd.f32 %v1990, %v2018
    %s2021 = scalar_lea.vmem [#allocation6], 360
    %v2022 = vld [vmem:[%s2021] sm:$0xf]
    %v2025 = vunpack.c.l.s4 1983009808
    %v2026 = vunpack.c.0.s8 %v2025
    %v2027 = vlaneseq
    %v2028 = vshrl.u32 %v2027, 7
    %v2029 = vsub.s32 %v2026, %v2028
    %v2030 = vrot.slane %v2022, %v2029
    %v2031 = vcombine.high %v2030, %v2030
    %v2034 = vmul.f32 %v2002, %v2030
    %v2035 = vmul.f32 %v2003, %v2031
    %v2036 = vadd.f32 %v2019, %v2034
    %v2037 = vadd.f32 %v2020, %v2035
    %2038 = vrot.lane.b32.xlu0 %v63, 83
    %v2039 = vpop.permute.xlu0 %2038
    %2040 = vrot.lane.b32.xlu0 %v64, 83
    %v2041 = vpop.permute.xlu0 %2040
    %vm2042 = vcmp.lt.s32.totalorder %v72, 83
    %v2043 = vsel %vm2042, %v2039, %v2041
    %v2044 = vsel %vm2042, %v2041, %v2039
    %2045 = vrot.lane.b32.xlu0 %v83, 83
    %v2046 = vpop.permute.xlu0 %2045
    %2047 = vrot.lane.b32.xlu0 %v84, 83
    %v2048 = vpop.permute.xlu0 %2047
    %v2049 = vsel %vm2042, %v2046, %v2048
    %v2050 = vsel %vm2042, %v2048, %v2046
    %s2051 = scalar_lea.vmem [#allocation6], 168
    %v2052 = vld [vmem:[%s2051] sm:$0xf]
    %v2055 = vunpack.c.l.s4 1983009808
    %v2056 = vunpack.c.0.s8 %v2055
    %v2057 = vlaneseq
    %v2058 = vshrl.u32 %v2057, 7
    %v2059 = vsub.s32 %v2056, %v2058
    %v2060 = vrot.slane %v2052, %v2059
    %v2061 = vcombine.high %v2060, %v2060
    %v2064 = vmul.f32 %v2043, %v2060
    %v2065 = vmul.f32 %v2044, %v2061
    %v2066 = vadd.f32 %v2036, %v2064
    %v2067 = vadd.f32 %v2037, %v2065
    %s2068 = scalar_lea.vmem [#allocation6], 364
    %v2069 = vld [vmem:[%s2068] sm:$0xf]
    %v2072 = vunpack.c.l.s4 1983009808
    %v2073 = vunpack.c.0.s8 %v2072
    %v2074 = vlaneseq
    %v2075 = vshrl.u32 %v2074, 7
    %v2076 = vsub.s32 %v2073, %v2075
    %v2077 = vrot.slane %v2069, %v2076
    %v2078 = vcombine.high %v2077, %v2077
    %v2081 = vmul.f32 %v2049, %v2077
    %v2082 = vmul.f32 %v2050, %v2078
    %v2083 = vadd.f32 %v2066, %v2081
    %v2084 = vadd.f32 %v2067, %v2082
    %2085 = vrot.lane.b32.xlu0 %v63, 82
    %v2086 = vpop.permute.xlu0 %2085
    %2087 = vrot.lane.b32.xlu0 %v64, 82
    %v2088 = vpop.permute.xlu0 %2087
    %vm2089 = vcmp.lt.s32.totalorder %v72, 82
    %v2090 = vsel %vm2089, %v2086, %v2088
    %v2091 = vsel %vm2089, %v2088, %v2086
    %2092 = vrot.lane.b32.xlu0 %v83, 82
    %v2093 = vpop.permute.xlu0 %2092
    %2094 = vrot.lane.b32.xlu0 %v84, 82
    %v2095 = vpop.permute.xlu0 %2094
    %v2096 = vsel %vm2089, %v2093, %v2095
    %v2097 = vsel %vm2089, %v2095, %v2093
    %s2098 = scalar_lea.vmem [#allocation6], 172
    %v2099 = vld [vmem:[%s2098] sm:$0xf]
    %v2102 = vunpack.c.l.s4 1983009808
    %v2103 = vunpack.c.0.s8 %v2102
    %v2104 = vlaneseq
    %v2105 = vshrl.u32 %v2104, 7
    %v2106 = vsub.s32 %v2103, %v2105
    %v2107 = vrot.slane %v2099, %v2106
    %v2108 = vcombine.high %v2107, %v2107
    %v2111 = vmul.f32 %v2090, %v2107
    %v2112 = vmul.f32 %v2091, %v2108
    %v2113 = vadd.f32 %v2083, %v2111
    %v2114 = vadd.f32 %v2084, %v2112
    %s2115 = scalar_lea.vmem [#allocation6], 368
    %v2116 = vld [vmem:[%s2115] sm:$0xf]
    %v2119 = vunpack.c.l.s4 1983009808
    %v2120 = vunpack.c.0.s8 %v2119
    %v2121 = vlaneseq
    %v2122 = vshrl.u32 %v2121, 7
    %v2123 = vsub.s32 %v2120, %v2122
    %v2124 = vrot.slane %v2116, %v2123
    %v2125 = vcombine.high %v2124, %v2124
    %v2128 = vmul.f32 %v2096, %v2124
    %v2129 = vmul.f32 %v2097, %v2125
    %v2130 = vadd.f32 %v2113, %v2128
    %v2131 = vadd.f32 %v2114, %v2129
    %2132 = vrot.lane.b32.xlu0 %v63, 81
    %v2133 = vpop.permute.xlu0 %2132
    %2134 = vrot.lane.b32.xlu0 %v64, 81
    %v2135 = vpop.permute.xlu0 %2134
    %vm2136 = vcmp.lt.s32.totalorder %v72, 81
    %v2137 = vsel %vm2136, %v2133, %v2135
    %v2138 = vsel %vm2136, %v2135, %v2133
    %2139 = vrot.lane.b32.xlu0 %v83, 81
    %v2140 = vpop.permute.xlu0 %2139
    %2141 = vrot.lane.b32.xlu0 %v84, 81
    %v2142 = vpop.permute.xlu0 %2141
    %v2143 = vsel %vm2136, %v2140, %v2142
    %v2144 = vsel %vm2136, %v2142, %v2140
    %s2145 = scalar_lea.vmem [#allocation6], 176
    %v2146 = vld [vmem:[%s2145] sm:$0xf]
    %v2149 = vunpack.c.l.s4 1983009808
    %v2150 = vunpack.c.0.s8 %v2149
    %v2151 = vlaneseq
    %v2152 = vshrl.u32 %v2151, 7
    %v2153 = vsub.s32 %v2150, %v2152
    %v2154 = vrot.slane %v2146, %v2153
    %v2155 = vcombine.high %v2154, %v2154
    %v2158 = vmul.f32 %v2137, %v2154
    %v2159 = vmul.f32 %v2138, %v2155
    %v2160 = vadd.f32 %v2130, %v2158
    %v2161 = vadd.f32 %v2131, %v2159
    %s2162 = scalar_lea.vmem [#allocation6], 372
    %v2163 = vld [vmem:[%s2162] sm:$0xf]
    %v2166 = vunpack.c.l.s4 1983009808
    %v2167 = vunpack.c.0.s8 %v2166
    %v2168 = vlaneseq
    %v2169 = vshrl.u32 %v2168, 7
    %v2170 = vsub.s32 %v2167, %v2169
    %v2171 = vrot.slane %v2163, %v2170
    %v2172 = vcombine.high %v2171, %v2171
    %v2175 = vmul.f32 %v2143, %v2171
    %v2176 = vmul.f32 %v2144, %v2172
    %v2177 = vadd.f32 %v2160, %v2175
    %v2178 = vadd.f32 %v2161, %v2176
    %2179 = vrot.lane.b32.xlu0 %v63, 80
    %v2180 = vpop.permute.xlu0 %2179
    %2181 = vrot.lane.b32.xlu0 %v64, 80
    %v2182 = vpop.permute.xlu0 %2181
    %vm2183 = vcmp.lt.s32.totalorder %v72, 80
    %v2184 = vsel %vm2183, %v2180, %v2182
    %v2185 = vsel %vm2183, %v2182, %v2180
    %2186 = vrot.lane.b32.xlu0 %v83, 80
    %v2187 = vpop.permute.xlu0 %2186
    %2188 = vrot.lane.b32.xlu0 %v84, 80
    %v2189 = vpop.permute.xlu0 %2188
    %v2190 = vsel %vm2183, %v2187, %v2189
    %v2191 = vsel %vm2183, %v2189, %v2187
    %s2192 = scalar_lea.vmem [#allocation6], 180
    %v2193 = vld [vmem:[%s2192] sm:$0xf]
    %v2196 = vunpack.c.l.s4 1983009808
    %v2197 = vunpack.c.0.s8 %v2196
    %v2198 = vlaneseq
    %v2199 = vshrl.u32 %v2198, 7
    %v2200 = vsub.s32 %v2197, %v2199
    %v2201 = vrot.slane %v2193, %v2200
    %v2202 = vcombine.high %v2201, %v2201
    %v2205 = vmul.f32 %v2184, %v2201
    %v2206 = vmul.f32 %v2185, %v2202
    %v2207 = vadd.f32 %v2177, %v2205
    %v2208 = vadd.f32 %v2178, %v2206
    %s2209 = scalar_lea.vmem [#allocation6], 376
    %v2210 = vld [vmem:[%s2209] sm:$0xf]
    %v2213 = vunpack.c.l.s4 1983009808
    %v2214 = vunpack.c.0.s8 %v2213
    %v2215 = vlaneseq
    %v2216 = vshrl.u32 %v2215, 7
    %v2217 = vsub.s32 %v2214, %v2216
    %v2218 = vrot.slane %v2210, %v2217
    %v2219 = vcombine.high %v2218, %v2218
    %v2222 = vmul.f32 %v2190, %v2218
    %v2223 = vmul.f32 %v2191, %v2219
    %v2224 = vadd.f32 %v2207, %v2222
    %v2225 = vadd.f32 %v2208, %v2223
    %2226 = vrot.lane.b32.xlu0 %v63, 79
    %v2227 = vpop.permute.xlu0 %2226
    %2228 = vrot.lane.b32.xlu0 %v64, 79
    %v2229 = vpop.permute.xlu0 %2228
    %vm2230 = vcmp.lt.s32.totalorder %v72, 79
    %v2231 = vsel %vm2230, %v2227, %v2229
    %v2232 = vsel %vm2230, %v2229, %v2227
    %2233 = vrot.lane.b32.xlu0 %v83, 79
    %v2234 = vpop.permute.xlu0 %2233
    %2235 = vrot.lane.b32.xlu0 %v84, 79
    %v2236 = vpop.permute.xlu0 %2235
    %v2237 = vsel %vm2230, %v2234, %v2236
    %v2238 = vsel %vm2230, %v2236, %v2234
    %s2239 = scalar_lea.vmem [#allocation6], 184
    %v2240 = vld [vmem:[%s2239] sm:$0xf]
    %v2243 = vunpack.c.l.s4 1983009808
    %v2244 = vunpack.c.0.s8 %v2243
    %v2245 = vlaneseq
    %v2246 = vshrl.u32 %v2245, 7
    %v2247 = vsub.s32 %v2244, %v2246
    %v2248 = vrot.slane %v2240, %v2247
    %v2249 = vcombine.high %v2248, %v2248
    %v2252 = vmul.f32 %v2231, %v2248
    %v2253 = vmul.f32 %v2232, %v2249
    %v2254 = vadd.f32 %v2224, %v2252
    %v2255 = vadd.f32 %v2225, %v2253
    %s2256 = scalar_lea.vmem [#allocation6], 380
    %v2257 = vld [vmem:[%s2256] sm:$0xf]
    %v2260 = vunpack.c.l.s4 1983009808
    %v2261 = vunpack.c.0.s8 %v2260
    %v2262 = vlaneseq
    %v2263 = vshrl.u32 %v2262, 7
    %v2264 = vsub.s32 %v2261, %v2263
    %v2265 = vrot.slane %v2257, %v2264
    %v2266 = vcombine.high %v2265, %v2265
    %v2269 = vmul.f32 %v2237, %v2265
    %v2270 = vmul.f32 %v2238, %v2266
    %v2271 = vadd.f32 %v2254, %v2269
    %v2272 = vadd.f32 %v2255, %v2270
    %2273 = vrot.lane.b32.xlu0 %v63, 78
    %v2274 = vpop.permute.xlu0 %2273
    %2275 = vrot.lane.b32.xlu0 %v64, 78
    %v2276 = vpop.permute.xlu0 %2275
    %vm2277 = vcmp.lt.s32.totalorder %v72, 78
    %v2278 = vsel %vm2277, %v2274, %v2276
    %v2279 = vsel %vm2277, %v2276, %v2274
    %2280 = vrot.lane.b32.xlu0 %v83, 78
    %v2281 = vpop.permute.xlu0 %2280
    %2282 = vrot.lane.b32.xlu0 %v84, 78
    %v2283 = vpop.permute.xlu0 %2282
    %v2284 = vsel %vm2277, %v2281, %v2283
    %v2285 = vsel %vm2277, %v2283, %v2281
    %s2286 = scalar_lea.vmem [#allocation6], 188
    %v2287 = vld [vmem:[%s2286] sm:$0xf]
    %v2290 = vunpack.c.l.s4 1983009808
    %v2291 = vunpack.c.0.s8 %v2290
    %v2292 = vlaneseq
    %v2293 = vshrl.u32 %v2292, 7
    %v2294 = vsub.s32 %v2291, %v2293
    %v2295 = vrot.slane %v2287, %v2294
    %v2296 = vcombine.high %v2295, %v2295
    %v2299 = vmul.f32 %v2278, %v2295
    %v2300 = vmul.f32 %v2279, %v2296
    %v2301 = vadd.f32 %v2271, %v2299
    %v2302 = vadd.f32 %v2272, %v2300
    %s2303 = scalar_lea.vmem [#allocation6], 384
    %v2304 = vld [vmem:[%s2303] sm:$0xf]
    %v2307 = vunpack.c.l.s4 1983009808
    %v2308 = vunpack.c.0.s8 %v2307
    %v2309 = vlaneseq
    %v2310 = vshrl.u32 %v2309, 7
    %v2311 = vsub.s32 %v2308, %v2310
    %v2312 = vrot.slane %v2304, %v2311
    %v2313 = vcombine.high %v2312, %v2312
    %v2316 = vmul.f32 %v2284, %v2312
    %v2317 = vmul.f32 %v2285, %v2313
    %v2318 = vadd.f32 %v2301, %v2316
    %v2319 = vadd.f32 %v2302, %v2317
    %2320 = vrot.lane.b32.xlu0 %v63, 77
    %v2321 = vpop.permute.xlu0 %2320
    %2322 = vrot.lane.b32.xlu0 %v64, 77
    %v2323 = vpop.permute.xlu0 %2322
    %vm2324 = vcmp.lt.s32.totalorder %v72, 77
    %v2325 = vsel %vm2324, %v2321, %v2323
    %v2326 = vsel %vm2324, %v2323, %v2321
    %2327 = vrot.lane.b32.xlu0 %v83, 77
    %v2328 = vpop.permute.xlu0 %2327
    %2329 = vrot.lane.b32.xlu0 %v84, 77
    %v2330 = vpop.permute.xlu0 %2329
    %v2331 = vsel %vm2324, %v2328, %v2330
    %v2332 = vsel %vm2324, %v2330, %v2328
    %s2333 = scalar_lea.vmem [#allocation6], 192
    %v2334 = vld [vmem:[%s2333] sm:$0xf]
    %v2337 = vunpack.c.l.s4 1983009808
    %v2338 = vunpack.c.0.s8 %v2337
    %v2339 = vlaneseq
    %v2340 = vshrl.u32 %v2339, 7
    %v2341 = vsub.s32 %v2338, %v2340
    %v2342 = vrot.slane %v2334, %v2341
    %v2343 = vcombine.high %v2342, %v2342
    %v2346 = vmul.f32 %v2325, %v2342
    %v2347 = vmul.f32 %v2326, %v2343
    %v2348 = vadd.f32 %v2318, %v2346
    %v2349 = vadd.f32 %v2319, %v2347
    %s2350 = scalar_lea.vmem [#allocation6], 388
    %v2351 = vld [vmem:[%s2350] sm:$0xf]
    %v2354 = vunpack.c.l.s4 1983009808
    %v2355 = vunpack.c.0.s8 %v2354
    %v2356 = vlaneseq
    %v2357 = vshrl.u32 %v2356, 7
    %v2358 = vsub.s32 %v2355, %v2357
    %v2359 = vrot.slane %v2351, %v2358
    %v2360 = vcombine.high %v2359, %v2359
    %v2363 = vmul.f32 %v2331, %v2359
    %v2364 = vmul.f32 %v2332, %v2360
    %v2365 = vadd.f32 %v2348, %v2363
    %v2366 = vadd.f32 %v2349, %v2364
    %v2367 = vxor.u32 %v2365, 2147483648
    %v2368 = vxor.u32 %v2366, 2147483648
    %v2369 = vmul.f32 %v2367, 1.442695
    %v2370 = vpow.pop %v2369
    %v2371 = vmul.f32 %v2368, 1.442695
    %v2372 = vpow.pop %v2371
    %v2373 = vadd.f32 %v2370, 1.0
    %v2374 = vadd.f32 %v2372, 1.0
    %v2375 = vrcp.pop %v2373
    %v2376 = vmul.f32 1.0, %v2375
    %v2377 = vrcp.pop %v2374
    %v2378 = vmul.f32 1.0, %v2377
    %v2381 = vcombine.low %v2376, %v2378
    %v2383 = vunpack.c.l.s4 1983009808
    %v2384 = vunpack.c.0.s8 %v2383
    %v2385 = vlaneseq
    %v2386 = vshrl.u32 %v2385, 7
    %v2387 = vsub.s32 %v2384, %v2386
    %v2388 = vrot.slane %v2381, %v2387
    %2390 = vst [vmem:[#allocation8] sm:$0xf] %v2388
    // Predicated region
    $region22: #{tpu_custom_call.1} parent=1 // pred_check
      _
    $region23: #{tpu_custom_call.1} parent=1 // pred_check_branch
      %2392 = sbr.rel (0) target = $region25
    $region24: #{tpu_custom_call.1} parent=1 // pred_region
      %s2394 = ssub.s32 64, 64
      %2395 = vsyncadd [#allocation5], %s2394
      %s2397 = sshll.u32 [#allocation8], 4
      %s2398 = int_to_ptr.vmem [resolvable:$true] %s2397
      %2400 = dma.vmem_to_hbm [thread:$0]  %s2398, 64, %s3, [#allocation5]
    $region25: #{tpu_custom_call.1} parent=1 // pred_fallthru
      _
    // Predicated region
    $region26: #{tpu_custom_call.1} parent=1 // pred_check
      _
    $region27: #{tpu_custom_call.1} parent=1 // pred_check_branch
      %2402 = sbr.rel (0) target = $region29
    $region28: #{tpu_custom_call.1} parent=1 // pred_region
      %2403 = dma.done [#allocation5], 64
    $region29: #{tpu_custom_call.1} parent=1 // pred_fallthru
      _
    %2404 = vsyncpa [#allocation4], 1
    %2405 = vsyncpa [#allocation7], 1
    %2406 = vsyncpa [#allocation5], 1

</llo_original>
